<compile_context>
chip_gen: v6e
topology: v6e:2x2x1
jax: 0.10.0
libtpu: 0.0.40
codegen_flags: <defaults>
</compile_context>

<pallas_src>
import functools

import numpy as np
import jax
import jax.numpy as jnp
from jax import lax
from jax.experimental import pallas as pl
from jax.experimental.pallas import tpu as pltpu


# ----------------------------------------------------------------------------
# Fused kernel: the entire ScheduledCNNRefine.forward for one batch element.
# All tensors live in the (C, HW) channel-on-sublane / pixel-on-lane layout.
# ----------------------------------------------------------------------------
def _refine_kernel(noisy_ref, feat_ref, temb_ref,
                   wne_ref, bne_ref,
                   wp0_ref, bp0_ref,
                   gng_ref, gnb_ref,
                   wp1_ref, bp1_ref,
                   gmat_ref, masks_ref,
                   o_ref,
                   *, H, W, Cn):
    HW = H * W

    # Boundary masks (compile-time host constants), hoisted once and shared by
    # all three convolutions.  Each is (1, HW).
    mask_rows = [masks_ref[i] for i in range(9)]

    def shifted_taps(x):
        """The nine zero-padded 3x3 taps of x (Cin, HW): lane rolls (XLU) + mask."""
        taps = []
        for kh in range(3):
            for kw in range(3):
                if kh == 1 and kw == 1:
                    taps.append(x)                       # center tap: mask is all-ones
                    continue
                off = (kh - 1) * W + (kw - 1)            # want shifted[i] = x[i + off]
                sh = pltpu.roll(x, shift=(-off) % HW, axis=1)
                taps.append(sh * mask_rows[kh * 3 + kw])
        return taps

    def conv3x3(x, w_flat_ref):
        """3x3 / stride-1 / pad-1 conv as ONE im2col matmul: (Cout,9Cin)@(9Cin,HW)."""
        patch = jnp.concatenate(shifted_taps(x), axis=0)     # (9*Cin, HW)
        return jnp.dot(w_flat_ref[...], patch,
                       preferred_element_type=jnp.float32)   # (Cout, HW)

    # --- feat = feat + time_embedding(t) + noise_embedding(noisy_image) -------
    # noise_embedding Conv2d(Cn -> C): 9*Cn broadcast-FMAs on the VPU (a K=1
    # matmul per tap would be the worst possible MXU shape), accumulated
    # directly into the feat/time-embedding sum.
    acc = feat_ref[0] + temb_ref[0] + bne_ref[...]            # (C, HW)
    for j, sh in enumerate(shifted_taps(noisy_ref[0])):       # sh: (Cn, HW)
        for ci in range(Cn):
            acc = acc + wne_ref[j * Cn + ci] * sh[ci:ci + 1, :]
    feat = acc                                                # (C, HW)

    # --- pred[0]: Conv2d(C -> C, 3x3, pad=1) ----------------------------------
    h = conv3x3(feat, wp0_ref) + bp0_ref[...]                 # (C, HW)

    # --- pred[1:3]: GroupNorm(4, C, eps=1e-5) + ReLU --------------------------
    s1 = jnp.sum(h, axis=1, keepdims=True)                    # (C, 1) lane reduce
    s2 = jnp.sum(h * h, axis=1, keepdims=True)                # (C, 1)
    g = jnp.dot(gmat_ref[...], jnp.concatenate([s1, s2], axis=1),
                preferred_element_type=jnp.float32)           # (C, 2): E[x], E[x^2]
    mean, ex2 = g[:, 0:1], g[:, 1:2]
    # TODO(synk): E[x^2]-E[x]^2 is fine at these magnitudes / tolerances; use a
    #             centered two-pass variance before scaling to real resolutions.
    inv = lax.rsqrt(ex2 - mean * mean + 1e-5)                 # (C, 1)
    a = inv * gng_ref[...]                                    # fold normalization:
    b = gnb_ref[...] - mean * a                               #   y = h*a + b
    y = jnp.maximum(h * a + b, 0.0)                           # (C, HW)

    # --- pred[3]: Conv2d(C -> Cno, 3x3, pad=1) --------------------------------
    o_ref[0] = conv3x3(y, wp1_ref) + bp1_ref[...]             # (Cno, HW), lane-dense


# ----------------------------------------------------------------------------
# Wrapper (PyTorch-style NCHW in / NCHW out)
# ----------------------------------------------------------------------------
def scheduled_cnn_refine(params, noisy_image, t, feat,
                         blur_depth=None, sparse_depth=None, sparse_mask=None,
                         *, num_groups=4):
    """Pallas TPU implementation of ScheduledCNNRefine.forward.

    noisy_image: (N, Cn, H, W)  t: int scalar or (N,) ints  feat: (N, C, H, W)
    blur_depth / sparse_depth / sparse_mask mirror the PyTorch signature but,
    exactly like the reference forward, are unused.
    """
    del blur_depth, sparse_depth, sparse_mask
    N, Cn, H, W = noisy_image.shape
    C = feat.shape[1]
    Cno = params['p1_w'].shape[-1]
    HW = H * W
    assert C % num_groups == 0

    # nn.Embedding lookup (a single 16-float gather) kept at the XLA level;
    # covers both the t.numel() == 1 branch and per-sample t.
    t_arr = jnp.atleast_1d(jnp.asarray(t, jnp.int32))
    temb = jnp.broadcast_to(params['time_embedding'][t_arr], (N, C))
    temb = temb.reshape(N, C, 1).astype(jnp.float32)          # lane-broadcast shape

    # NCHW already has channels on the sublane axis; flattening H*W onto lanes is
    # a pure reshape (no transposes, no strided DMA).
    noisy_rows = noisy_image.reshape(N, Cn, HW).astype(jnp.float32)
    feat_rows = feat.reshape(N, C, HW).astype(jnp.float32)

    # Conv weights flattened for the im2col matmul: (3,3,Cin,Cout) -> (Cout, 9*Cin),
    # K ordered (kh, kw, cin) to match the tap stacking inside the kernel.
    def flat_w(w):
        kh, kw, cin, cout = w.shape
        return jnp.transpose(w, (3, 0, 1, 2)).reshape(cout, kh * kw * cin) \
                  .astype(jnp.float32)

    wp0_flat = flat_w(params['p0_w'])                          # (C, 9*C)
    wp1_flat = flat_w(params['p1_w'])                          # (Cno, 9*C)
    # Noise-conv weights per tap as (9*Cn, C, 1) for the VPU FMA path.
    wne_taps = params['ne_w'].astype(jnp.float32).reshape(9 * Cn, C)[..., None]

    # Compile-time boundary masks for the 9 taps (zero-padding semantics).
    hh = np.arange(H)[:, None]
    ww = np.arange(W)[None, :]
    mask_np = np.zeros((9, 1, HW), np.float32)
    for kh in range(3):
        for kw in range(3):
            dh, dw = kh - 1, kw - 1
            valid = ((hh + dh >= 0) & (hh + dh < H) &
                     (ww + dw >= 0) & (ww + dw < W))
            mask_np[kh * 3 + kw, 0] = valid.astype(np.float32).reshape(-1)
    masks = jnp.asarray(mask_np)                               # (9, 1, HW)

    # Compile-time GroupNorm group-averaging matrix: (gmat @ s)[c] = group-mean.
    cg = C // num_groups
    gidx = np.arange(C) // cg
    gmat = jnp.asarray((gidx[:, None] == gidx[None, :]).astype(np.float32)
                       / float(HW * cg))

    kernel = functools.partial(_refine_kernel, H=H, W=W, Cn=Cn)
    out = pl.pallas_call(
        kernel,
        out_shape=jax.ShapeDtypeStruct((N, Cno, HW), jnp.float32),
        grid=(N,),
        in_specs=[
            pl.BlockSpec((1, Cn, HW), lambda n: (n, 0, 0)),        # noisy image
            pl.BlockSpec((1, C, HW), lambda n: (n, 0, 0)),         # feat
            pl.BlockSpec((1, C, 1), lambda n: (n, 0, 0)),          # time embedding
            pl.BlockSpec((9 * Cn, C, 1), lambda n: (0, 0, 0)),     # noise conv W (taps)
            pl.BlockSpec((C, 1), lambda n: (0, 0)),                # noise conv b
            pl.BlockSpec((C, 9 * C), lambda n: (0, 0)),            # pred[0] W (im2col)
            pl.BlockSpec((C, 1), lambda n: (0, 0)),                # pred[0] b
            pl.BlockSpec((C, 1), lambda n: (0, 0)),                # GN gamma
            pl.BlockSpec((C, 1), lambda n: (0, 0)),                # GN beta
            pl.BlockSpec((Cno, 9 * C), lambda n: (0, 0)),          # pred[3] W (im2col)
            pl.BlockSpec((Cno, 1), lambda n: (0, 0)),              # pred[3] b
            pl.BlockSpec((C, C), lambda n: (0, 0)),                # GN group matrix
            pl.BlockSpec((9, 1, HW), lambda n: (0, 0, 0)),         # tap boundary masks
        ],
        out_specs=pl.BlockSpec((1, Cno, HW), lambda n: (n, 0, 0)),
        compiler_params=pltpu.CompilerParams(
            dimension_semantics=("parallel",)),                    # both TCs on v7x
    )(noisy_rows, feat_rows, temb,
      wne_taps, params['ne_b'].reshape(C, 1).astype(jnp.float32),
      wp0_flat, params['p0_b'].reshape(C, 1).astype(jnp.float32),
      params['gn_g'].reshape(C, 1).astype(jnp.float32),
      params['gn_b'].reshape(C, 1).astype(jnp.float32),
      wp1_flat, params['p1_b'].reshape(Cno, 1).astype(jnp.float32),
      gmat, masks)

    return out.reshape(N, Cno, H, W)                               # NCHW


# ----------------------------------------------------------------------------
# Pure-JAX reference (for a correctness check against the fused kernel)
# ----------------------------------------------------------------------------
def _reference_forward(params, noisy_image, t, feat, *, num_groups=4):
    dn = ('NCHW', 'HWIO', 'NCHW')

    def conv(x, w, b):
        y = lax.conv_general_dilated(x, w, (1, 1), ((1, 1), (1, 1)),
                                     dimension_numbers=dn)
        return y + b[None, :, None, None]

    N, C = feat.shape[0], feat.shape[1]
    t_arr = jnp.atleast_1d(jnp.asarray(t, jnp.int32))
    temb = jnp.broadcast_to(params['time_embedding'][t_arr], (N, C))
    f = feat + temb[:, :, None, None]
    f = f + conv(noisy_image, params['ne_w'], params['ne_b'])
    h = conv(f, params['p0_w'], params['p0_b'])
    _, _, H, W = h.shape
    hg = h.reshape(N, num_groups, C // num_groups, H, W)
    mu = hg.mean(axis=(2, 3, 4), keepdims=True)
    var = hg.var(axis=(2, 3, 4), keepdims=True)
    hn = ((hg - mu) / jnp.sqrt(var + 1e-5)).reshape(N, C, H, W)
    hn = hn * params['gn_g'][None, :, None, None] + params['gn_b'][None, :, None, None]
    hn = jnp.maximum(hn, 0.0)
    return conv(hn, params['p1_w'], params['p1_b'])


# ----------------------------------------------------------------------------
# Synthetic parameters (conv weights stored HWIO)
# ----------------------------------------------------------------------------
def init_params(key, C=16, Cn=1):
    ks = jax.random.split(key, 9)
    nrm = lambda k, s, sc=0.05: sc * jax.random.normal(k, s, jnp.float32)
    return {
        'time_embedding': nrm(ks[0], (1280, C)),             # nn.Embedding(1280, C)
        'ne_w': nrm(ks[1], (3, 3, Cn, C)),                    # Conv2d(Cn -> 16)
        'ne_b': nrm(ks[2], (C,)),
        'p0_w': nrm(ks[3], (3, 3, C, C)),                     # Conv2d(16 -> 16)
        'p0_b': nrm(ks[4], (C,)),
        'gn_g': 1.0 + 0.1 * jax.random.normal(ks[5], (C,), jnp.float32),
        'gn_b': 0.1 * jax.random.normal(ks[6], (C,), jnp.float32),
        'p1_w': nrm(ks[7], (3, 3, C, Cn)),                    # Conv2d(16 -> Cn)
        'p1_b': nrm(ks[8], (Cn,)),
    }


# ----------------------------------------------------------------------------
if __name__ == "__main__":
    key = jax.random.PRNGKey(0)
    k_feat, k_noisy, k_par = jax.random.split(key, 3)

    N, C, Cn, H, W = 2, 16, 1, 16, 16
    feat = jax.random.normal(k_feat, (N, C, H, W), jnp.float32)
    noisy_image = jax.random.normal(k_noisy, (N, Cn, H, W), jnp.float32)
    blur_depth = jnp.zeros((N, Cn, H, W), jnp.float32)      # unused by forward
    sparse_depth = jnp.zeros((N, Cn, H, W), jnp.float32)    # unused by forward
    sparse_mask = jnp.zeros((N, Cn, H, W), jnp.float32)     # unused by forward
    t = jnp.array(37, jnp.int32)                            # t.numel() == 1 branch

    params = init_params(k_par, C=C, Cn=Cn)

    fwd = jax.jit(scheduled_cnn_refine)
    ret = fwd(params, noisy_image, t, feat, blur_depth, sparse_depth, sparse_mask)
    jax.block_until_ready(ret)
    assert ret.shape == (N, Cn, H, W)

    ref = _reference_forward(params, noisy_image, t, feat)
    np.testing.assert_allclose(np.asarray(ret), np.asarray(ref),
                               rtol=1e-3, atol=1e-3)
    print("KERNEL_OK")
</pallas_src>

<mosaic_0001>
module attributes {stable_mosaic.version = 11 : i64} {
  func.func @_refine_kernel(%arg0: i32, %arg1: memref<1x1x256xf32, #tpu.memory_space<vmem>>, %arg2: memref<1x16x256xf32, #tpu.memory_space<vmem>>, %arg3: memref<1x16x1xf32, #tpu.memory_space<vmem>>, %arg4: memref<9x16x1xf32, #tpu.memory_space<vmem>>, %arg5: memref<16x1xf32, #tpu.memory_space<vmem>>, %arg6: memref<16x144xf32, #tpu.memory_space<vmem>>, %arg7: memref<16x1xf32, #tpu.memory_space<vmem>>, %arg8: memref<16x1xf32, #tpu.memory_space<vmem>>, %arg9: memref<16x1xf32, #tpu.memory_space<vmem>>, %arg10: memref<1x144xf32, #tpu.memory_space<vmem>>, %arg11: memref<1x1xf32, #tpu.memory_space<vmem>>, %arg12: memref<16x16xf32, #tpu.memory_space<vmem>>, %arg13: memref<9x1x256xf32, #tpu.memory_space<vmem>>, %arg14: memref<1x1x256xf32, #tpu.memory_space<vmem>>) attributes {dimension_semantics = [#tpu.dimension_semantics<parallel>], iteration_bounds = array<i64: 2>, scalar_prefetch = 0 : i64, scratch_operands = 0 : i64, tpu.core_type = #tpu.core_type<tc>, window_params = [{transform_indices = @transform_0, window_bounds = array<i64: 1, 1, 256>}, {transform_indices = @transform_1, window_bounds = array<i64: 1, 16, 256>}, {transform_indices = @transform_2, window_bounds = array<i64: 1, 16, 1>}, {pipeline_mode = #tpu.pipeline_mode<synchronous>, transform_indices = @transform_3, window_bounds = array<i64: 9, 16, 1>}, {pipeline_mode = #tpu.pipeline_mode<synchronous>, transform_indices = @transform_4, window_bounds = array<i64: 16, 1>}, {pipeline_mode = #tpu.pipeline_mode<synchronous>, transform_indices = @transform_5, window_bounds = array<i64: 16, 144>}, {pipeline_mode = #tpu.pipeline_mode<synchronous>, transform_indices = @transform_6, window_bounds = array<i64: 16, 1>}, {pipeline_mode = #tpu.pipeline_mode<synchronous>, transform_indices = @transform_7, window_bounds = array<i64: 16, 1>}, {pipeline_mode = #tpu.pipeline_mode<synchronous>, transform_indices = @transform_8, window_bounds = array<i64: 16, 1>}, {pipeline_mode = #tpu.pipeline_mode<synchronous>, transform_indices = @transform_9, window_bounds = array<i64: 1, 144>}, {pipeline_mode = #tpu.pipeline_mode<synchronous>, transform_indices = @transform_10, window_bounds = array<i64: 1, 1>}, {pipeline_mode = #tpu.pipeline_mode<synchronous>, transform_indices = @transform_11, window_bounds = array<i64: 16, 16>}, {pipeline_mode = #tpu.pipeline_mode<synchronous>, transform_indices = @transform_12, window_bounds = array<i64: 9, 1, 256>}, {transform_indices = @transform_13, window_bounds = array<i64: 1, 1, 256>}]} {
    %c0 = arith.constant 0 : index
    %c0_0 = arith.constant 0 : index
    %c0_1 = arith.constant 0 : index
    %0 = vector.load %arg13[%c0, %c0_0, %c0_1] : memref<9x1x256xf32, #tpu.memory_space<vmem>>, vector<1x1x256xf32>
    %1 = vector.shape_cast %0 : vector<1x1x256xf32> to vector<1x256xf32>
    %c1 = arith.constant 1 : index
    %c0_2 = arith.constant 0 : index
    %c0_3 = arith.constant 0 : index
    %2 = vector.load %arg13[%c1, %c0_2, %c0_3] : memref<9x1x256xf32, #tpu.memory_space<vmem>>, vector<1x1x256xf32>
    %3 = vector.shape_cast %2 : vector<1x1x256xf32> to vector<1x256xf32>
    %c2 = arith.constant 2 : index
    %c0_4 = arith.constant 0 : index
    %c0_5 = arith.constant 0 : index
    %4 = vector.load %arg13[%c2, %c0_4, %c0_5] : memref<9x1x256xf32, #tpu.memory_space<vmem>>, vector<1x1x256xf32>
    %5 = vector.shape_cast %4 : vector<1x1x256xf32> to vector<1x256xf32>
    %c3 = arith.constant 3 : index
    %c0_6 = arith.constant 0 : index
    %c0_7 = arith.constant 0 : index
    %6 = vector.load %arg13[%c3, %c0_6, %c0_7] : memref<9x1x256xf32, #tpu.memory_space<vmem>>, vector<1x1x256xf32>
    %7 = vector.shape_cast %6 : vector<1x1x256xf32> to vector<1x256xf32>
    %c5 = arith.constant 5 : index
    %c0_8 = arith.constant 0 : index
    %c0_9 = arith.constant 0 : index
    %8 = vector.load %arg13[%c5, %c0_8, %c0_9] : memref<9x1x256xf32, #tpu.memory_space<vmem>>, vector<1x1x256xf32>
    %9 = vector.shape_cast %8 : vector<1x1x256xf32> to vector<1x256xf32>
    %c6 = arith.constant 6 : index
    %c0_10 = arith.constant 0 : index
    %c0_11 = arith.constant 0 : index
    %10 = vector.load %arg13[%c6, %c0_10, %c0_11] : memref<9x1x256xf32, #tpu.memory_space<vmem>>, vector<1x1x256xf32>
    %11 = vector.shape_cast %10 : vector<1x1x256xf32> to vector<1x256xf32>
    %c7 = arith.constant 7 : index
    %c0_12 = arith.constant 0 : index
    %c0_13 = arith.constant 0 : index
    %12 = vector.load %arg13[%c7, %c0_12, %c0_13] : memref<9x1x256xf32, #tpu.memory_space<vmem>>, vector<1x1x256xf32>
    %13 = vector.shape_cast %12 : vector<1x1x256xf32> to vector<1x256xf32>
    %c8 = arith.constant 8 : index
    %c0_14 = arith.constant 0 : index
    %c0_15 = arith.constant 0 : index
    %14 = vector.load %arg13[%c8, %c0_14, %c0_15] : memref<9x1x256xf32, #tpu.memory_space<vmem>>, vector<1x1x256xf32>
    %15 = vector.shape_cast %14 : vector<1x1x256xf32> to vector<1x256xf32>
    %c0_16 = arith.constant 0 : index
    %c0_17 = arith.constant 0 : index
    %c0_18 = arith.constant 0 : index
    %16 = vector.load %arg2[%c0_16, %c0_17, %c0_18] : memref<1x16x256xf32, #tpu.memory_space<vmem>>, vector<1x16x256xf32>
    %17 = vector.shape_cast %16 : vector<1x16x256xf32> to vector<16x256xf32>
    %c0_19 = arith.constant 0 : index
    %c0_20 = arith.constant 0 : index
    %c0_21 = arith.constant 0 : index
    %18 = vector.load %arg3[%c0_19, %c0_20, %c0_21] : memref<1x16x1xf32, #tpu.memory_space<vmem>>, vector<1x16x1xf32>
    %19 = vector.shape_cast %18 : vector<1x16x1xf32> to vector<16x1xf32>
    %20 = vector.broadcast %19 : vector<16x1xf32> to vector<16x256xf32>
    %21 = arith.addf %17, %20 : vector<16x256xf32>
    %c0_22 = arith.constant 0 : index
    %c0_23 = arith.constant 0 : index
    %22 = vector.load %arg5[%c0_22, %c0_23] : memref<16x1xf32, #tpu.memory_space<vmem>>, vector<16x1xf32>
    %23 = vector.broadcast %22 : vector<16x1xf32> to vector<16x256xf32>
    %24 = arith.addf %21, %23 : vector<16x256xf32>
    %c0_24 = arith.constant 0 : index
    %c0_25 = arith.constant 0 : index
    %c0_26 = arith.constant 0 : index
    %25 = vector.load %arg1[%c0_24, %c0_25, %c0_26] : memref<1x1x256xf32, #tpu.memory_space<vmem>>, vector<1x1x256xf32>
    %26 = vector.shape_cast %25 : vector<1x1x256xf32> to vector<1x256xf32>
    %c17_i32 = arith.constant 17 : i32
    %27 = tpu.dynamic_rotate %26 by %c17_i32 dim 1 : vector<1x256xf32>, i32 -> vector<1x256xf32>
    %28 = arith.mulf %27, %1 : vector<1x256xf32>
    %c16_i32 = arith.constant 16 : i32
    %29 = tpu.dynamic_rotate %26 by %c16_i32 dim 1 : vector<1x256xf32>, i32 -> vector<1x256xf32>
    %30 = arith.mulf %29, %3 : vector<1x256xf32>
    %c15_i32 = arith.constant 15 : i32
    %31 = tpu.dynamic_rotate %26 by %c15_i32 dim 1 : vector<1x256xf32>, i32 -> vector<1x256xf32>
    %32 = arith.mulf %31, %5 : vector<1x256xf32>
    %c1_i32 = arith.constant 1 : i32
    %33 = tpu.dynamic_rotate %26 by %c1_i32 dim 1 : vector<1x256xf32>, i32 -> vector<1x256xf32>
    %34 = arith.mulf %33, %7 : vector<1x256xf32>
    %c255_i32 = arith.constant 255 : i32
    %35 = tpu.dynamic_rotate %26 by %c255_i32 dim 1 : vector<1x256xf32>, i32 -> vector<1x256xf32>
    %36 = arith.mulf %35, %9 : vector<1x256xf32>
    %c241_i32 = arith.constant 241 : i32
    %37 = tpu.dynamic_rotate %26 by %c241_i32 dim 1 : vector<1x256xf32>, i32 -> vector<1x256xf32>
    %38 = arith.mulf %37, %11 : vector<1x256xf32>
    %c240_i32 = arith.constant 240 : i32
    %39 = tpu.dynamic_rotate %26 by %c240_i32 dim 1 : vector<1x256xf32>, i32 -> vector<1x256xf32>
    %40 = arith.mulf %39, %13 : vector<1x256xf32>
    %c239_i32 = arith.constant 239 : i32
    %41 = tpu.dynamic_rotate %26 by %c239_i32 dim 1 : vector<1x256xf32>, i32 -> vector<1x256xf32>
    %42 = arith.mulf %41, %15 : vector<1x256xf32>
    %c0_27 = arith.constant 0 : index
    %c0_28 = arith.constant 0 : index
    %c0_29 = arith.constant 0 : index
    %43 = vector.load %arg4[%c0_27, %c0_28, %c0_29] : memref<9x16x1xf32, #tpu.memory_space<vmem>>, vector<1x16x1xf32>
    %44 = vector.shape_cast %43 : vector<1x16x1xf32> to vector<16x1xf32>
    %45 = vector.broadcast %44 : vector<16x1xf32> to vector<16x256xf32>
    %46 = vector.broadcast %28 : vector<1x256xf32> to vector<16x256xf32>
    %47 = arith.mulf %45, %46 : vector<16x256xf32>
    %48 = arith.addf %24, %47 : vector<16x256xf32>
    %c1_30 = arith.constant 1 : index
    %c0_31 = arith.constant 0 : index
    %c0_32 = arith.constant 0 : index
    %49 = vector.load %arg4[%c1_30, %c0_31, %c0_32] : memref<9x16x1xf32, #tpu.memory_space<vmem>>, vector<1x16x1xf32>
    %50 = vector.shape_cast %49 : vector<1x16x1xf32> to vector<16x1xf32>
    %51 = vector.broadcast %50 : vector<16x1xf32> to vector<16x256xf32>
    %52 = vector.broadcast %30 : vector<1x256xf32> to vector<16x256xf32>
    %53 = arith.mulf %51, %52 : vector<16x256xf32>
    %54 = arith.addf %48, %53 : vector<16x256xf32>
    %c2_33 = arith.constant 2 : index
    %c0_34 = arith.constant 0 : index
    %c0_35 = arith.constant 0 : index
    %55 = vector.load %arg4[%c2_33, %c0_34, %c0_35] : memref<9x16x1xf32, #tpu.memory_space<vmem>>, vector<1x16x1xf32>
    %56 = vector.shape_cast %55 : vector<1x16x1xf32> to vector<16x1xf32>
    %57 = vector.broadcast %56 : vector<16x1xf32> to vector<16x256xf32>
    %58 = vector.broadcast %32 : vector<1x256xf32> to vector<16x256xf32>
    %59 = arith.mulf %57, %58 : vector<16x256xf32>
    %60 = arith.addf %54, %59 : vector<16x256xf32>
    %c3_36 = arith.constant 3 : index
    %c0_37 = arith.constant 0 : index
    %c0_38 = arith.constant 0 : index
    %61 = vector.load %arg4[%c3_36, %c0_37, %c0_38] : memref<9x16x1xf32, #tpu.memory_space<vmem>>, vector<1x16x1xf32>
    %62 = vector.shape_cast %61 : vector<1x16x1xf32> to vector<16x1xf32>
    %63 = vector.broadcast %62 : vector<16x1xf32> to vector<16x256xf32>
    %64 = vector.broadcast %34 : vector<1x256xf32> to vector<16x256xf32>
    %65 = arith.mulf %63, %64 : vector<16x256xf32>
    %66 = arith.addf %60, %65 : vector<16x256xf32>
    %c4 = arith.constant 4 : index
    %c0_39 = arith.constant 0 : index
    %c0_40 = arith.constant 0 : index
    %67 = vector.load %arg4[%c4, %c0_39, %c0_40] : memref<9x16x1xf32, #tpu.memory_space<vmem>>, vector<1x16x1xf32>
    %68 = vector.shape_cast %67 : vector<1x16x1xf32> to vector<16x1xf32>
    %69 = vector.broadcast %68 : vector<16x1xf32> to vector<16x256xf32>
    %70 = vector.broadcast %26 : vector<1x256xf32> to vector<16x256xf32>
    %71 = arith.mulf %69, %70 : vector<16x256xf32>
    %72 = arith.addf %66, %71 : vector<16x256xf32>
    %c5_41 = arith.constant 5 : index
    %c0_42 = arith.constant 0 : index
    %c0_43 = arith.constant 0 : index
    %73 = vector.load %arg4[%c5_41, %c0_42, %c0_43] : memref<9x16x1xf32, #tpu.memory_space<vmem>>, vector<1x16x1xf32>
    %74 = vector.shape_cast %73 : vector<1x16x1xf32> to vector<16x1xf32>
    %75 = vector.broadcast %74 : vector<16x1xf32> to vector<16x256xf32>
    %76 = vector.broadcast %36 : vector<1x256xf32> to vector<16x256xf32>
    %77 = arith.mulf %75, %76 : vector<16x256xf32>
    %78 = arith.addf %72, %77 : vector<16x256xf32>
    %c6_44 = arith.constant 6 : index
    %c0_45 = arith.constant 0 : index
    %c0_46 = arith.constant 0 : index
    %79 = vector.load %arg4[%c6_44, %c0_45, %c0_46] : memref<9x16x1xf32, #tpu.memory_space<vmem>>, vector<1x16x1xf32>
    %80 = vector.shape_cast %79 : vector<1x16x1xf32> to vector<16x1xf32>
    %81 = vector.broadcast %80 : vector<16x1xf32> to vector<16x256xf32>
    %82 = vector.broadcast %38 : vector<1x256xf32> to vector<16x256xf32>
    %83 = arith.mulf %81, %82 : vector<16x256xf32>
    %84 = arith.addf %78, %83 : vector<16x256xf32>
    %c7_47 = arith.constant 7 : index
    %c0_48 = arith.constant 0 : index
    %c0_49 = arith.constant 0 : index
    %85 = vector.load %arg4[%c7_47, %c0_48, %c0_49] : memref<9x16x1xf32, #tpu.memory_space<vmem>>, vector<1x16x1xf32>
    %86 = vector.shape_cast %85 : vector<1x16x1xf32> to vector<16x1xf32>
    %87 = vector.broadcast %86 : vector<16x1xf32> to vector<16x256xf32>
    %88 = vector.broadcast %40 : vector<1x256xf32> to vector<16x256xf32>
    %89 = arith.mulf %87, %88 : vector<16x256xf32>
    %90 = arith.addf %84, %89 : vector<16x256xf32>
    %c8_50 = arith.constant 8 : index
    %c0_51 = arith.constant 0 : index
    %c0_52 = arith.constant 0 : index
    %91 = vector.load %arg4[%c8_50, %c0_51, %c0_52] : memref<9x16x1xf32, #tpu.memory_space<vmem>>, vector<1x16x1xf32>
    %92 = vector.shape_cast %91 : vector<1x16x1xf32> to vector<16x1xf32>
    %93 = vector.broadcast %92 : vector<16x1xf32> to vector<16x256xf32>
    %94 = vector.broadcast %42 : vector<1x256xf32> to vector<16x256xf32>
    %95 = arith.mulf %93, %94 : vector<16x256xf32>
    %96 = arith.addf %90, %95 : vector<16x256xf32>
    %c17_i32_53 = arith.constant 17 : i32
    %97 = tpu.dynamic_rotate %96 by %c17_i32_53 dim 1 : vector<16x256xf32>, i32 -> vector<16x256xf32>
    %98 = vector.broadcast %1 : vector<1x256xf32> to vector<16x256xf32>
    %99 = arith.mulf %97, %98 : vector<16x256xf32>
    %c16_i32_54 = arith.constant 16 : i32
    %100 = tpu.dynamic_rotate %96 by %c16_i32_54 dim 1 : vector<16x256xf32>, i32 -> vector<16x256xf32>
    %101 = vector.broadcast %3 : vector<1x256xf32> to vector<16x256xf32>
    %102 = arith.mulf %100, %101 : vector<16x256xf32>
    %c15_i32_55 = arith.constant 15 : i32
    %103 = tpu.dynamic_rotate %96 by %c15_i32_55 dim 1 : vector<16x256xf32>, i32 -> vector<16x256xf32>
    %104 = vector.broadcast %5 : vector<1x256xf32> to vector<16x256xf32>
    %105 = arith.mulf %103, %104 : vector<16x256xf32>
    %c1_i32_56 = arith.constant 1 : i32
    %106 = tpu.dynamic_rotate %96 by %c1_i32_56 dim 1 : vector<16x256xf32>, i32 -> vector<16x256xf32>
    %107 = vector.broadcast %7 : vector<1x256xf32> to vector<16x256xf32>
    %108 = arith.mulf %106, %107 : vector<16x256xf32>
    %c255_i32_57 = arith.constant 255 : i32
    %109 = tpu.dynamic_rotate %96 by %c255_i32_57 dim 1 : vector<16x256xf32>, i32 -> vector<16x256xf32>
    %110 = vector.broadcast %9 : vector<1x256xf32> to vector<16x256xf32>
    %111 = arith.mulf %109, %110 : vector<16x256xf32>
    %c241_i32_58 = arith.constant 241 : i32
    %112 = tpu.dynamic_rotate %96 by %c241_i32_58 dim 1 : vector<16x256xf32>, i32 -> vector<16x256xf32>
    %113 = vector.broadcast %11 : vector<1x256xf32> to vector<16x256xf32>
    %114 = arith.mulf %112, %113 : vector<16x256xf32>
    %c240_i32_59 = arith.constant 240 : i32
    %115 = tpu.dynamic_rotate %96 by %c240_i32_59 dim 1 : vector<16x256xf32>, i32 -> vector<16x256xf32>
    %116 = vector.broadcast %13 : vector<1x256xf32> to vector<16x256xf32>
    %117 = arith.mulf %115, %116 : vector<16x256xf32>
    %c239_i32_60 = arith.constant 239 : i32
    %118 = tpu.dynamic_rotate %96 by %c239_i32_60 dim 1 : vector<16x256xf32>, i32 -> vector<16x256xf32>
    %119 = vector.broadcast %15 : vector<1x256xf32> to vector<16x256xf32>
    %120 = arith.mulf %118, %119 : vector<16x256xf32>
    %121 = tpu.concatenate %99, %102, %105, %108, %96, %111, %114, %117, %120 in 0 : vector<16x256xf32>, vector<16x256xf32>, vector<16x256xf32>, vector<16x256xf32>, vector<16x256xf32>, vector<16x256xf32>, vector<16x256xf32>, vector<16x256xf32>, vector<16x256xf32> -> vector<144x256xf32>
    %c0_61 = arith.constant 0 : index
    %c0_62 = arith.constant 0 : index
    %122 = vector.load %arg6[%c0_61, %c0_62] : memref<16x144xf32, #tpu.memory_space<vmem>>, vector<16x144xf32>
    %cst = arith.constant dense<0.000000e+00> : vector<16x256xf32>
    %123 = tpu.matmul %122, %121, %cst {dimension_numbers = #tpu.dot_dimension_numbers<[1], [0], [0], [1], [0, 0, 1, 1], [], []>} : vector<16x144xf32>, vector<144x256xf32>, vector<16x256xf32> -> vector<16x256xf32>
    %c0_63 = arith.constant 0 : index
    %c0_64 = arith.constant 0 : index
    %124 = vector.load %arg7[%c0_63, %c0_64] : memref<16x1xf32, #tpu.memory_space<vmem>>, vector<16x1xf32>
    %125 = vector.broadcast %124 : vector<16x1xf32> to vector<16x256xf32>
    %126 = arith.addf %123, %125 : vector<16x256xf32>
    %cst_65 = arith.constant dense<0.000000e+00> : vector<16xf32>
    %127 = vector.multi_reduction <add>, %126, %cst_65 [1] : vector<16x256xf32> to vector<16xf32>
    %128 = vector.shape_cast %127 : vector<16xf32> to vector<16x1xf32>
    %129 = arith.mulf %126, %126 : vector<16x256xf32>
    %cst_66 = arith.constant dense<0.000000e+00> : vector<16xf32>
    %130 = vector.multi_reduction <add>, %129, %cst_66 [1] : vector<16x256xf32> to vector<16xf32>
    %131 = vector.shape_cast %130 : vector<16xf32> to vector<16x1xf32>
    %c0_67 = arith.constant 0 : index
    %c0_68 = arith.constant 0 : index
    %132 = vector.load %arg12[%c0_67, %c0_68] : memref<16x16xf32, #tpu.memory_space<vmem>>, vector<16x16xf32>
    %133 = tpu.concatenate %128, %131 in 1 : vector<16x1xf32>, vector<16x1xf32> -> vector<16x2xf32>
    %cst_69 = arith.constant dense<0.000000e+00> : vector<16x2xf32>
    %134 = tpu.matmul %132, %133, %cst_69 {dimension_numbers = #tpu.dot_dimension_numbers<[1], [0], [0], [1], [0, 0, 1, 1], [], []>} : vector<16x16xf32>, vector<16x2xf32>, vector<16x2xf32> -> vector<16x2xf32>
    %135 = vector.extract_strided_slice %134 {offsets = [0, 0], sizes = [16, 1], strides = [1, 1]} : vector<16x2xf32> to vector<16x1xf32>
    %136 = vector.extract_strided_slice %134 {offsets = [0, 1], sizes = [16, 1], strides = [1, 1]} : vector<16x2xf32> to vector<16x1xf32>
    %137 = arith.mulf %135, %135 : vector<16x1xf32>
    %138 = arith.subf %136, %137 : vector<16x1xf32>
    %cst_70 = arith.constant 9.99999974E-6 : f32
    %139 = vector.broadcast %cst_70 : f32 to vector<16x1xf32>
    %140 = arith.addf %138, %139 : vector<16x1xf32>
    %141 = math.rsqrt %140 : vector<16x1xf32>
    %c0_71 = arith.constant 0 : index
    %c0_72 = arith.constant 0 : index
    %142 = vector.load %arg8[%c0_71, %c0_72] : memref<16x1xf32, #tpu.memory_space<vmem>>, vector<16x1xf32>
    %143 = arith.mulf %141, %142 : vector<16x1xf32>
    %c0_73 = arith.constant 0 : index
    %c0_74 = arith.constant 0 : index
    %144 = vector.load %arg9[%c0_73, %c0_74] : memref<16x1xf32, #tpu.memory_space<vmem>>, vector<16x1xf32>
    %145 = arith.mulf %135, %143 : vector<16x1xf32>
    %146 = arith.subf %144, %145 : vector<16x1xf32>
    %147 = vector.broadcast %143 : vector<16x1xf32> to vector<16x256xf32>
    %148 = arith.mulf %126, %147 : vector<16x256xf32>
    %149 = vector.broadcast %146 : vector<16x1xf32> to vector<16x256xf32>
    %150 = arith.addf %148, %149 : vector<16x256xf32>
    %cst_75 = arith.constant 0.000000e+00 : f32
    %151 = vector.broadcast %cst_75 : f32 to vector<16x256xf32>
    %152 = arith.maximumf %150, %151 : vector<16x256xf32>
    %c17_i32_76 = arith.constant 17 : i32
    %153 = tpu.dynamic_rotate %152 by %c17_i32_76 dim 1 : vector<16x256xf32>, i32 -> vector<16x256xf32>
    %154 = vector.broadcast %1 : vector<1x256xf32> to vector<16x256xf32>
    %155 = arith.mulf %153, %154 : vector<16x256xf32>
    %c16_i32_77 = arith.constant 16 : i32
    %156 = tpu.dynamic_rotate %152 by %c16_i32_77 dim 1 : vector<16x256xf32>, i32 -> vector<16x256xf32>
    %157 = vector.broadcast %3 : vector<1x256xf32> to vector<16x256xf32>
    %158 = arith.mulf %156, %157 : vector<16x256xf32>
    %c15_i32_78 = arith.constant 15 : i32
    %159 = tpu.dynamic_rotate %152 by %c15_i32_78 dim 1 : vector<16x256xf32>, i32 -> vector<16x256xf32>
    %160 = vector.broadcast %5 : vector<1x256xf32> to vector<16x256xf32>
    %161 = arith.mulf %159, %160 : vector<16x256xf32>
    %c1_i32_79 = arith.constant 1 : i32
    %162 = tpu.dynamic_rotate %152 by %c1_i32_79 dim 1 : vector<16x256xf32>, i32 -> vector<16x256xf32>
    %163 = vector.broadcast %7 : vector<1x256xf32> to vector<16x256xf32>
    %164 = arith.mulf %162, %163 : vector<16x256xf32>
    %c255_i32_80 = arith.constant 255 : i32
    %165 = tpu.dynamic_rotate %152 by %c255_i32_80 dim 1 : vector<16x256xf32>, i32 -> vector<16x256xf32>
    %166 = vector.broadcast %9 : vector<1x256xf32> to vector<16x256xf32>
    %167 = arith.mulf %165, %166 : vector<16x256xf32>
    %c241_i32_81 = arith.constant 241 : i32
    %168 = tpu.dynamic_rotate %152 by %c241_i32_81 dim 1 : vector<16x256xf32>, i32 -> vector<16x256xf32>
    %169 = vector.broadcast %11 : vector<1x256xf32> to vector<16x256xf32>
    %170 = arith.mulf %168, %169 : vector<16x256xf32>
    %c240_i32_82 = arith.constant 240 : i32
    %171 = tpu.dynamic_rotate %152 by %c240_i32_82 dim 1 : vector<16x256xf32>, i32 -> vector<16x256xf32>
    %172 = vector.broadcast %13 : vector<1x256xf32> to vector<16x256xf32>
    %173 = arith.mulf %171, %172 : vector<16x256xf32>
    %c239_i32_83 = arith.constant 239 : i32
    %174 = tpu.dynamic_rotate %152 by %c239_i32_83 dim 1 : vector<16x256xf32>, i32 -> vector<16x256xf32>
    %175 = vector.broadcast %15 : vector<1x256xf32> to vector<16x256xf32>
    %176 = arith.mulf %174, %175 : vector<16x256xf32>
    %177 = tpu.concatenate %155, %158, %161, %164, %152, %167, %170, %173, %176 in 0 : vector<16x256xf32>, vector<16x256xf32>, vector<16x256xf32>, vector<16x256xf32>, vector<16x256xf32>, vector<16x256xf32>, vector<16x256xf32>, vector<16x256xf32>, vector<16x256xf32> -> vector<144x256xf32>
    %c0_84 = arith.constant 0 : index
    %c0_85 = arith.constant 0 : index
    %178 = vector.load %arg10[%c0_84, %c0_85] : memref<1x144xf32, #tpu.memory_space<vmem>>, vector<1x144xf32>
    %cst_86 = arith.constant dense<0.000000e+00> : vector<1x256xf32>
    %179 = tpu.matmul %178, %177, %cst_86 {dimension_numbers = #tpu.dot_dimension_numbers<[1], [0], [0], [1], [0, 0, 1, 1], [], []>} : vector<1x144xf32>, vector<144x256xf32>, vector<1x256xf32> -> vector<1x256xf32>
    %c0_87 = arith.constant 0 : index
    %c0_88 = arith.constant 0 : index
    %180 = vector.load %arg11[%c0_87, %c0_88] : memref<1x1xf32, #tpu.memory_space<vmem>>, vector<1x1xf32>
    %181 = vector.broadcast %180 : vector<1x1xf32> to vector<1x256xf32>
    %182 = arith.addf %179, %181 : vector<1x256xf32>
    %c0_89 = arith.constant 0 : index
    %c0_90 = arith.constant 0 : index
    %c0_91 = arith.constant 0 : index
    %183 = vector.load %arg14[%c0_89, %c0_90, %c0_91] : memref<1x1x256xf32, #tpu.memory_space<vmem>>, vector<1x1x256xf32>
    %184 = vector.shape_cast %183 : vector<1x1x256xf32> to vector<1x256xf32>
    %185 = vector.shape_cast %182 : vector<1x256xf32> to vector<1x1x256xf32>
    tpu.vector_store %arg14[%c0_89, %c0_90, %c0_91], %185 {strides = array<i32>} : memref<1x1x256xf32, #tpu.memory_space<vmem>>, vector<1x1x256xf32>,
    return
  }
  func.func @transform_0(%arg0: i32) -> (i32, i32, i32) {
    %c0_i32 = arith.constant 0 : i32
    %c0_i32_0 = arith.constant 0 : i32
    %c0_i32_1 = arith.constant 0 : i32
    return %arg0, %c0_i32, %c0_i32_0 : i32, i32, i32
  }
  func.func @transform_1(%arg0: i32) -> (i32, i32, i32) {
    %c0_i32 = arith.constant 0 : i32
    %c0_i32_0 = arith.constant 0 : i32
    %c0_i32_1 = arith.constant 0 : i32
    return %arg0, %c0_i32, %c0_i32_0 : i32, i32, i32
  }
  func.func @transform_2(%arg0: i32) -> (i32, i32, i32) {
    %c0_i32 = arith.constant 0 : i32
    %c0_i32_0 = arith.constant 0 : i32
    %c0_i32_1 = arith.constant 0 : i32
    return %arg0, %c0_i32, %c0_i32_0 : i32, i32, i32
  }
  func.func @transform_3(%arg0: i32) -> (i32, i32, i32) {
    %c0_i32 = arith.constant 0 : i32
    %c0_i32_0 = arith.constant 0 : i32
    %c0_i32_1 = arith.constant 0 : i32
    %c0_i32_2 = arith.constant 0 : i32
    return %c0_i32, %c0_i32_0, %c0_i32_1 : i32, i32, i32
  }
  func.func @transform_4(%arg0: i32) -> (i32, i32) {
    %c0_i32 = arith.constant 0 : i32
    %c0_i32_0 = arith.constant 0 : i32
    %c0_i32_1 = arith.constant 0 : i32
    return %c0_i32, %c0_i32_0 : i32, i32
  }
  func.func @transform_5(%arg0: i32) -> (i32, i32) {
    %c0_i32 = arith.constant 0 : i32
    %c0_i32_0 = arith.constant 0 : i32
    %c0_i32_1 = arith.constant 0 : i32
    return %c0_i32, %c0_i32_0 : i32, i32
  }
  func.func @transform_6(%arg0: i32) -> (i32, i32) {
    %c0_i32 = arith.constant 0 : i32
    %c0_i32_0 = arith.constant 0 : i32
    %c0_i32_1 = arith.constant 0 : i32
    return %c0_i32, %c0_i32_0 : i32, i32
  }
  func.func @transform_7(%arg0: i32) -> (i32, i32) {
    %c0_i32 = arith.constant 0 : i32
    %c0_i32_0 = arith.constant 0 : i32
    %c0_i32_1 = arith.constant 0 : i32
    return %c0_i32, %c0_i32_0 : i32, i32
  }
  func.func @transform_8(%arg0: i32) -> (i32, i32) {
    %c0_i32 = arith.constant 0 : i32
    %c0_i32_0 = arith.constant 0 : i32
    %c0_i32_1 = arith.constant 0 : i32
    return %c0_i32, %c0_i32_0 : i32, i32
  }
  func.func @transform_9(%arg0: i32) -> (i32, i32) {
    %c0_i32 = arith.constant 0 : i32
    %c0_i32_0 = arith.constant 0 : i32
    %c0_i32_1 = arith.constant 0 : i32
    return %c0_i32, %c0_i32_0 : i32, i32
  }
  func.func @transform_10(%arg0: i32) -> (i32, i32) {
    %c0_i32 = arith.constant 0 : i32
    %c0_i32_0 = arith.constant 0 : i32
    %c0_i32_1 = arith.constant 0 : i32
    return %c0_i32, %c0_i32_0 : i32, i32
  }
  func.func @transform_11(%arg0: i32) -> (i32, i32) {
    %c0_i32 = arith.constant 0 : i32
    %c0_i32_0 = arith.constant 0 : i32
    %c0_i32_1 = arith.constant 0 : i32
    return %c0_i32, %c0_i32_0 : i32, i32
  }
  func.func @transform_12(%arg0: i32) -> (i32, i32, i32) {
    %c0_i32 = arith.constant 0 : i32
    %c0_i32_0 = arith.constant 0 : i32
    %c0_i32_1 = arith.constant 0 : i32
    %c0_i32_2 = arith.constant 0 : i32
    return %c0_i32, %c0_i32_0, %c0_i32_1 : i32, i32, i32
  }
  func.func @transform_13(%arg0: i32) -> (i32, i32, i32) {
    %c0_i32 = arith.constant 0 : i32
    %c0_i32_0 = arith.constant 0 : i32
    %c0_i32_1 = arith.constant 0 : i32
    return %arg0, %c0_i32, %c0_i32_0 : i32, i32, i32
  }
}

</mosaic_0001>

<llo_original>
// kernel: scheduled_cnn_refine.1
$region0: #{scheduled_cnn_refine.1}
  #allocation0 [shape = 'u32[]', space=smem, size = 0x4, offset = 0x4, fixed_abs, tag = 'smem constant byte address 0x4 - core index']
  #allocation1 [shape = 'u32[144,128]{1,0:T(1,128)}', space=vmem, size = 0x12000, scoped, tag = 'internal scratch']
  #allocation2 [shape = 'f32[1,1]{1,0:T(1,128)S(1)}', space=vmem, size = 0x200, scoped, tag = 'scoped memory for scheduled_cnn_refine.1']
  %s0 = inlined_call_operand.vmem [shape: f32[2,1,256], index: 0, kind: input, shape index: {}]
  %s1 = inlined_call_operand.vmem [shape: f32[2,16,256], index: 1, kind: input, shape index: {}]
  %s2 = inlined_call_operand.vmem [shape: f32[2,16,1], index: 2, kind: input, shape index: {}]
  %s3 = inlined_call_operand.vmem [shape: f32[9,16,1], index: 3, kind: input, shape index: {}]
  %s4 = inlined_call_operand.vmem [shape: f32[16,1], index: 4, kind: input, shape index: {}]
  %s5 = inlined_call_operand.vmem [shape: f32[16,144], index: 5, kind: input, shape index: {}]
  %s6 = inlined_call_operand.vmem [shape: f32[16,1], index: 6, kind: input, shape index: {}]
  %s7 = inlined_call_operand.vmem [shape: f32[16,1], index: 7, kind: input, shape index: {}]
  %s8 = inlined_call_operand.vmem [shape: f32[16,1], index: 8, kind: input, shape index: {}]
  %s9 = inlined_call_operand.vmem [shape: f32[1,144], index: 9, kind: input, shape index: {}]
  %s10 = inlined_call_operand.<no memory space> [shape: f32[1,1], index: 10, kind: input, shape index: {}]
  %s11 = inlined_call_operand.vmem [shape: f32[16,16], index: 11, kind: input, shape index: {}]
  %s12 = inlined_call_operand.vmem [shape: f32[9,1,256], index: 12, kind: input, shape index: {}]
  %s13 = inlined_call_operand.vmem [shape: f32[2,1,256], index: 13, kind: output, shape index: {}]
  %s14 = sld [smem:[#allocation0]]
  $region85: #{scheduled_cnn_refine.1} parent=0
    _
  %s16 = ssub.s32 1, %s14
  %s17 = scalar_select 0, %s16, %s14
  %v18 = vstv %s10
  %19 = vst [vmem:[#allocation2] sm:$0x1] %v18
  loop: start=0, step=1, limit=4
  $region2: #{scheduled_cnn_refine.1} parent=0 // loop_pre_header
    _
  $region3: #{scheduled_cnn_refine.1} parent=0 // loop_header
    %s21 = sphi 0, %s25
    %p22 = scmp.ge.s32.totalorder %s21, 4
    %s31 = sphi 0, %s33
    %s34 = sphi 0, %s31
    %s35 = sphi 0, %s34
    %s51 = sphi 0, %s35
    %s57 = sphi 0, %s59
    %s60 = sphi 0, %s57
    %s61 = sphi 0, %s60
    %s77 = sphi 0, %s61
    %s83 = sphi 0, %s85
    %s86 = sphi 0, %s83
    %s87 = sphi 0, %s86
    %s103 = sphi 0, %s87
    %s107 = sphi 0, %s107
    %s109 = sphi 0, %s107
    %s110 = sphi 0, %s109
    %s124 = sphi 0, %s110
    %s128 = sphi 0, %s128
    %s130 = sphi 0, %s128
    %s131 = sphi 0, %s130
    %s145 = sphi 0, %s131
    %s149 = sphi 0, %s149
    %s151 = sphi 0, %s149
    %s152 = sphi 0, %s151
    %s166 = sphi 0, %s152
    %s170 = sphi 0, %s170
    %s172 = sphi 0, %s170
    %s173 = sphi 0, %s172
    %s187 = sphi 0, %s173
    %s191 = sphi 0, %s191
    %s193 = sphi 0, %s191
    %s194 = sphi 0, %s193
    %s208 = sphi 0, %s194
    %s212 = sphi 0, %s212
    %s214 = sphi 0, %s212
    %s215 = sphi 0, %s214
    %s229 = sphi 0, %s215
    %s233 = sphi 0, %s233
    %s235 = sphi 0, %s233
    %s236 = sphi 0, %s235
    %s250 = sphi 0, %s236
    %s254 = sphi 0, %s254
    %s256 = sphi 0, %s254
    %s257 = sphi 0, %s256
    %s271 = sphi 0, %s257
    %s275 = sphi 0, %s275
    %s277 = sphi 0, %s275
    %s278 = sphi 0, %s277
    %s292 = sphi 0, %s278
    %s296 = sphi 0, %s296
    %s298 = sphi 0, %s296
    %s299 = sphi 0, %s298
    %s313 = sphi 0, %s299
    %s319 = sphi 0, %s321
    %s322 = sphi 0, %s319
    %s323 = sphi 0, %s322
    %s339 = sphi 0, %s323
  $region4: #{scheduled_cnn_refine.1} parent=0 // loop_header_branch
    %24 = sbr.rel (%p22) target = $region8
  $region5: #{scheduled_cnn_refine.1} parent=0 // loop_body
    %s26 = ssub.s32 %s21, 1
    %s27 = ssub.s32 %s21, 2
    %s28 = sadd.s32 %s21, 1
    %s29 = ssub.s32 %s21, %s28
    %p30 = scmp.eq.s32.totalorder %s29, 0
    %s32 = sadd.s32 %s31, 1
    %s33 = scalar_select %p30, %s31, %s32
    %p36 = pneg %p30
    %p37 = scmp.eq.s32.totalorder %s21, 1
    %p38 = por %p36, %p37
    %p39 = scmp.ne.s32.totalorder %s31, %s34
    %p40 = scmp.eq.s32.totalorder %s21, 0
    %p41 = por %p39, %p40
    %p42 = scmp.ne.s32.totalorder %s31, %s34
    %p43 = scmp.eq.s32.totalorder %s26, 1
    %p44 = por %p42, %p43
    %p45 = scmp.ne.s32.totalorder %s34, %s35
    %p46 = scmp.eq.s32.totalorder %s26, 0
    %p47 = por %p45, %p46
    %p48 = scmp.ne.s32.totalorder %s34, %s35
    %p49 = scmp.eq.s32.totalorder %s27, 1
    %p50 = por %p48, %p49
    %p52 = scmp.ne.s32.totalorder %s35, %s51
    %p53 = scmp.eq.s32.totalorder %s27, 0
    %p54 = por %p52, %p53
    %s55 = ssub.s32 %s21, %s28
    %p56 = scmp.eq.s32.totalorder %s55, 0
    %s58 = sadd.s32 %s57, 1
    %s59 = scalar_select %p56, %s57, %s58
    %p62 = pneg %p56
    %p63 = scmp.eq.s32.totalorder %s21, 1
    %p64 = por %p62, %p63
    %p65 = scmp.ne.s32.totalorder %s57, %s60
    %p66 = scmp.eq.s32.totalorder %s21, 0
    %p67 = por %p65, %p66
    %p68 = scmp.ne.s32.totalorder %s57, %s60
    %p69 = scmp.eq.s32.totalorder %s26, 1
    %p70 = por %p68, %p69
    %p71 = scmp.ne.s32.totalorder %s60, %s61
    %p72 = scmp.eq.s32.totalorder %s26, 0
    %p73 = por %p71, %p72
    %p74 = scmp.ne.s32.totalorder %s60, %s61
    %p75 = scmp.eq.s32.totalorder %s27, 1
    %p76 = por %p74, %p75
    %p78 = scmp.ne.s32.totalorder %s61, %s77
    %p79 = scmp.eq.s32.totalorder %s27, 0
    %p80 = por %p78, %p79
    %s81 = ssub.s32 %s21, %s28
    %p82 = scmp.eq.s32.totalorder %s81, 0
    %s84 = sadd.s32 %s83, 1
    %s85 = scalar_select %p82, %s83, %s84
    %p88 = pneg %p82
    %p89 = scmp.eq.s32.totalorder %s21, 1
    %p90 = por %p88, %p89
    %p91 = scmp.ne.s32.totalorder %s83, %s86
    %p92 = scmp.eq.s32.totalorder %s21, 0
    %p93 = por %p91, %p92
    %p94 = scmp.ne.s32.totalorder %s83, %s86
    %p95 = scmp.eq.s32.totalorder %s26, 1
    %p96 = por %p94, %p95
    %p97 = scmp.ne.s32.totalorder %s86, %s87
    %p98 = scmp.eq.s32.totalorder %s26, 0
    %p99 = por %p97, %p98
    %p100 = scmp.ne.s32.totalorder %s86, %s87
    %p101 = scmp.eq.s32.totalorder %s27, 1
    %p102 = por %p100, %p101
    %p104 = scmp.ne.s32.totalorder %s87, %s103
    %p105 = scmp.eq.s32.totalorder %s27, 0
    %p106 = por %p104, %p105
    %s108 = sadd.s32 %s107, 1
    %p111 = scmp.eq.s32.totalorder %s21, 1
    %p112 = scmp.ne.s32.totalorder %s107, %s109
    %p113 = scmp.eq.s32.totalorder %s21, 0
    %p114 = por %p112, %p113
    %p115 = scmp.ne.s32.totalorder %s107, %s109
    %p116 = scmp.eq.s32.totalorder %s26, 1
    %p117 = por %p115, %p116
    %p118 = scmp.ne.s32.totalorder %s109, %s110
    %p119 = scmp.eq.s32.totalorder %s26, 0
    %p120 = por %p118, %p119
    %p121 = scmp.ne.s32.totalorder %s109, %s110
    %p122 = scmp.eq.s32.totalorder %s27, 1
    %p123 = por %p121, %p122
    %p125 = scmp.ne.s32.totalorder %s110, %s124
    %p126 = scmp.eq.s32.totalorder %s27, 0
    %p127 = por %p125, %p126
    %s129 = sadd.s32 %s128, 1
    %p132 = scmp.eq.s32.totalorder %s21, 1
    %p133 = scmp.ne.s32.totalorder %s128, %s130
    %p134 = scmp.eq.s32.totalorder %s21, 0
    %p135 = por %p133, %p134
    %p136 = scmp.ne.s32.totalorder %s128, %s130
    %p137 = scmp.eq.s32.totalorder %s26, 1
    %p138 = por %p136, %p137
    %p139 = scmp.ne.s32.totalorder %s130, %s131
    %p140 = scmp.eq.s32.totalorder %s26, 0
    %p141 = por %p139, %p140
    %p142 = scmp.ne.s32.totalorder %s130, %s131
    %p143 = scmp.eq.s32.totalorder %s27, 1
    %p144 = por %p142, %p143
    %p146 = scmp.ne.s32.totalorder %s131, %s145
    %p147 = scmp.eq.s32.totalorder %s27, 0
    %p148 = por %p146, %p147
    %s150 = sadd.s32 %s149, 1
    %p153 = scmp.eq.s32.totalorder %s21, 1
    %p154 = scmp.ne.s32.totalorder %s149, %s151
    %p155 = scmp.eq.s32.totalorder %s21, 0
    %p156 = por %p154, %p155
    %p157 = scmp.ne.s32.totalorder %s149, %s151
    %p158 = scmp.eq.s32.totalorder %s26, 1
    %p159 = por %p157, %p158
    %p160 = scmp.ne.s32.totalorder %s151, %s152
    %p161 = scmp.eq.s32.totalorder %s26, 0
    %p162 = por %p160, %p161
    %p163 = scmp.ne.s32.totalorder %s151, %s152
    %p164 = scmp.eq.s32.totalorder %s27, 1
    %p165 = por %p163, %p164
    %p167 = scmp.ne.s32.totalorder %s152, %s166
    %p168 = scmp.eq.s32.totalorder %s27, 0
    %p169 = por %p167, %p168
    %s171 = sadd.s32 %s170, 1
    %p174 = scmp.eq.s32.totalorder %s21, 1
    %p175 = scmp.ne.s32.totalorder %s170, %s172
    %p176 = scmp.eq.s32.totalorder %s21, 0
    %p177 = por %p175, %p176
    %p178 = scmp.ne.s32.totalorder %s170, %s172
    %p179 = scmp.eq.s32.totalorder %s26, 1
    %p180 = por %p178, %p179
    %p181 = scmp.ne.s32.totalorder %s172, %s173
    %p182 = scmp.eq.s32.totalorder %s26, 0
    %p183 = por %p181, %p182
    %p184 = scmp.ne.s32.totalorder %s172, %s173
    %p185 = scmp.eq.s32.totalorder %s27, 1
    %p186 = por %p184, %p185
    %p188 = scmp.ne.s32.totalorder %s173, %s187
    %p189 = scmp.eq.s32.totalorder %s27, 0
    %p190 = por %p188, %p189
    %s192 = sadd.s32 %s191, 1
    %p195 = scmp.eq.s32.totalorder %s21, 1
    %p196 = scmp.ne.s32.totalorder %s191, %s193
    %p197 = scmp.eq.s32.totalorder %s21, 0
    %p198 = por %p196, %p197
    %p199 = scmp.ne.s32.totalorder %s191, %s193
    %p200 = scmp.eq.s32.totalorder %s26, 1
    %p201 = por %p199, %p200
    %p202 = scmp.ne.s32.totalorder %s193, %s194
    %p203 = scmp.eq.s32.totalorder %s26, 0
    %p204 = por %p202, %p203
    %p205 = scmp.ne.s32.totalorder %s193, %s194
    %p206 = scmp.eq.s32.totalorder %s27, 1
    %p207 = por %p205, %p206
    %p209 = scmp.ne.s32.totalorder %s194, %s208
    %p210 = scmp.eq.s32.totalorder %s27, 0
    %p211 = por %p209, %p210
    %s213 = sadd.s32 %s212, 1
    %p216 = scmp.eq.s32.totalorder %s21, 1
    %p217 = scmp.ne.s32.totalorder %s212, %s214
    %p218 = scmp.eq.s32.totalorder %s21, 0
    %p219 = por %p217, %p218
    %p220 = scmp.ne.s32.totalorder %s212, %s214
    %p221 = scmp.eq.s32.totalorder %s26, 1
    %p222 = por %p220, %p221
    %p223 = scmp.ne.s32.totalorder %s214, %s215
    %p224 = scmp.eq.s32.totalorder %s26, 0
    %p225 = por %p223, %p224
    %p226 = scmp.ne.s32.totalorder %s214, %s215
    %p227 = scmp.eq.s32.totalorder %s27, 1
    %p228 = por %p226, %p227
    %p230 = scmp.ne.s32.totalorder %s215, %s229
    %p231 = scmp.eq.s32.totalorder %s27, 0
    %p232 = por %p230, %p231
    %s234 = sadd.s32 %s233, 1
    %p237 = scmp.eq.s32.totalorder %s21, 1
    %p238 = scmp.ne.s32.totalorder %s233, %s235
    %p239 = scmp.eq.s32.totalorder %s21, 0
    %p240 = por %p238, %p239
    %p241 = scmp.ne.s32.totalorder %s233, %s235
    %p242 = scmp.eq.s32.totalorder %s26, 1
    %p243 = por %p241, %p242
    %p244 = scmp.ne.s32.totalorder %s235, %s236
    %p245 = scmp.eq.s32.totalorder %s26, 0
    %p246 = por %p244, %p245
    %p247 = scmp.ne.s32.totalorder %s235, %s236
    %p248 = scmp.eq.s32.totalorder %s27, 1
    %p249 = por %p247, %p248
    %p251 = scmp.ne.s32.totalorder %s236, %s250
    %p252 = scmp.eq.s32.totalorder %s27, 0
    %p253 = por %p251, %p252
    %s255 = sadd.s32 %s254, 1
    %p258 = scmp.eq.s32.totalorder %s21, 1
    %p259 = scmp.ne.s32.totalorder %s254, %s256
    %p260 = scmp.eq.s32.totalorder %s21, 0
    %p261 = por %p259, %p260
    %p262 = scmp.ne.s32.totalorder %s254, %s256
    %p263 = scmp.eq.s32.totalorder %s26, 1
    %p264 = por %p262, %p263
    %p265 = scmp.ne.s32.totalorder %s256, %s257
    %p266 = scmp.eq.s32.totalorder %s26, 0
    %p267 = por %p265, %p266
    %p268 = scmp.ne.s32.totalorder %s256, %s257
    %p269 = scmp.eq.s32.totalorder %s27, 1
    %p270 = por %p268, %p269
    %p272 = scmp.ne.s32.totalorder %s257, %s271
    %p273 = scmp.eq.s32.totalorder %s27, 0
    %p274 = por %p272, %p273
    %s276 = sadd.s32 %s275, 1
    %p279 = scmp.eq.s32.totalorder %s21, 1
    %p280 = scmp.ne.s32.totalorder %s275, %s277
    %p281 = scmp.eq.s32.totalorder %s21, 0
    %p282 = por %p280, %p281
    %p283 = scmp.ne.s32.totalorder %s275, %s277
    %p284 = scmp.eq.s32.totalorder %s26, 1
    %p285 = por %p283, %p284
    %p286 = scmp.ne.s32.totalorder %s277, %s278
    %p287 = scmp.eq.s32.totalorder %s26, 0
    %p288 = por %p286, %p287
    %p289 = scmp.ne.s32.totalorder %s277, %s278
    %p290 = scmp.eq.s32.totalorder %s27, 1
    %p291 = por %p289, %p290
    %p293 = scmp.ne.s32.totalorder %s278, %s292
    %p294 = scmp.eq.s32.totalorder %s27, 0
    %p295 = por %p293, %p294
    %s297 = sadd.s32 %s296, 1
    %p300 = scmp.eq.s32.totalorder %s21, 1
    %p301 = scmp.ne.s32.totalorder %s296, %s298
    %p302 = scmp.eq.s32.totalorder %s21, 0
    %p303 = por %p301, %p302
    %p304 = scmp.ne.s32.totalorder %s296, %s298
    %p305 = scmp.eq.s32.totalorder %s26, 1
    %p306 = por %p304, %p305
    %p307 = scmp.ne.s32.totalorder %s298, %s299
    %p308 = scmp.eq.s32.totalorder %s26, 0
    %p309 = por %p307, %p308
    %p310 = scmp.ne.s32.totalorder %s298, %s299
    %p311 = scmp.eq.s32.totalorder %s27, 1
    %p312 = por %p310, %p311
    %p314 = scmp.ne.s32.totalorder %s299, %s313
    %p315 = scmp.eq.s32.totalorder %s27, 0
    %p316 = por %p314, %p315
    %s317 = ssub.s32 %s21, %s28
    %p318 = scmp.eq.s32.totalorder %s317, 0
    %s320 = sadd.s32 %s319, 1
    %s321 = scalar_select %p318, %s319, %s320
    %p324 = pneg %p318
    %p325 = scmp.eq.s32.totalorder %s21, 1
    %p326 = por %p324, %p325
    %p327 = scmp.ne.s32.totalorder %s319, %s322
    %p328 = scmp.eq.s32.totalorder %s21, 0
    %p329 = por %p327, %p328
    %p330 = scmp.ne.s32.totalorder %s319, %s322
    %p331 = scmp.eq.s32.totalorder %s26, 1
    %p332 = por %p330, %p331
    %p333 = scmp.ne.s32.totalorder %s322, %s323
    %p334 = scmp.eq.s32.totalorder %s26, 0
    %p335 = por %p333, %p334
    %p336 = scmp.ne.s32.totalorder %s322, %s323
    %p337 = scmp.eq.s32.totalorder %s27, 1
    %p338 = por %p336, %p337
    %p340 = scmp.ne.s32.totalorder %s323, %s339
    %p341 = scmp.eq.s32.totalorder %s27, 0
    %p342 = por %p340, %p341
    %p343 = scmp.le.s32.totalorder 1, %s21
    %p344 = scmp.lt.s32.totalorder %s21, 3
    %p345 = pnand %p343, %p344
    %p346 = pneg %p345
    // Predicated region
    $region9: #{scheduled_cnn_refine.1} parent=5 // pred_check
      _
    $region10: #{scheduled_cnn_refine.1} parent=5 // pred_check_branch
      %348 = sbr.rel (%p345) target = $region12
    $region11: #{scheduled_cnn_refine.1} parent=5 // pred_region
      %s349 = ssub.s32 %s21, 1
      // Predicated region
      $region13: #{scheduled_cnn_refine.1} parent=11 // pred_check
        %p350 = pneg %p120
      $region14: #{scheduled_cnn_refine.1} parent=11 // pred_check_branch
        %352 = sbr.rel (%p350) target = $region16
      $region15: #{scheduled_cnn_refine.1} parent=11 // pred_region
        _
      $region16: #{scheduled_cnn_refine.1} parent=11 // pred_fallthru
        _
      // Predicated region
      $region17: #{scheduled_cnn_refine.1} parent=11 // pred_check
        %p353 = pneg %p141
      $region18: #{scheduled_cnn_refine.1} parent=11 // pred_check_branch
        %355 = sbr.rel (%p353) target = $region20
      $region19: #{scheduled_cnn_refine.1} parent=11 // pred_region
        _
      $region20: #{scheduled_cnn_refine.1} parent=11 // pred_fallthru
        _
      // Predicated region
      $region21: #{scheduled_cnn_refine.1} parent=11 // pred_check
        %p356 = pneg %p162
      $region22: #{scheduled_cnn_refine.1} parent=11 // pred_check_branch
        %358 = sbr.rel (%p356) target = $region24
      $region23: #{scheduled_cnn_refine.1} parent=11 // pred_region
        _
      $region24: #{scheduled_cnn_refine.1} parent=11 // pred_fallthru
        _
      // Predicated region
      $region25: #{scheduled_cnn_refine.1} parent=11 // pred_check
        %p359 = pneg %p183
      $region26: #{scheduled_cnn_refine.1} parent=11 // pred_check_branch
        %361 = sbr.rel (%p359) target = $region28
      $region27: #{scheduled_cnn_refine.1} parent=11 // pred_region
        _
      $region28: #{scheduled_cnn_refine.1} parent=11 // pred_fallthru
        _
      // Predicated region
      $region29: #{scheduled_cnn_refine.1} parent=11 // pred_check
        %p362 = pneg %p204
      $region30: #{scheduled_cnn_refine.1} parent=11 // pred_check_branch
        %364 = sbr.rel (%p362) target = $region32
      $region31: #{scheduled_cnn_refine.1} parent=11 // pred_region
        _
      $region32: #{scheduled_cnn_refine.1} parent=11 // pred_fallthru
        _
      // Predicated region
      $region33: #{scheduled_cnn_refine.1} parent=11 // pred_check
        %p365 = pneg %p225
      $region34: #{scheduled_cnn_refine.1} parent=11 // pred_check_branch
        %367 = sbr.rel (%p365) target = $region36
      $region35: #{scheduled_cnn_refine.1} parent=11 // pred_region
        _
      $region36: #{scheduled_cnn_refine.1} parent=11 // pred_fallthru
        _
      // Predicated region
      $region37: #{scheduled_cnn_refine.1} parent=11 // pred_check
        %p368 = pneg %p246
      $region38: #{scheduled_cnn_refine.1} parent=11 // pred_check_branch
        %370 = sbr.rel (%p368) target = $region40
      $region39: #{scheduled_cnn_refine.1} parent=11 // pred_region
        _
      $region40: #{scheduled_cnn_refine.1} parent=11 // pred_fallthru
        _
      // Predicated region
      $region41: #{scheduled_cnn_refine.1} parent=11 // pred_check
        %p371 = pneg %p267
      $region42: #{scheduled_cnn_refine.1} parent=11 // pred_check_branch
        %373 = sbr.rel (%p371) target = $region44
      $region43: #{scheduled_cnn_refine.1} parent=11 // pred_region
        _
      $region44: #{scheduled_cnn_refine.1} parent=11 // pred_fallthru
        _
      // Predicated region
      $region45: #{scheduled_cnn_refine.1} parent=11 // pred_check
        %p374 = pneg %p288
      $region46: #{scheduled_cnn_refine.1} parent=11 // pred_check_branch
        %376 = sbr.rel (%p374) target = $region48
      $region47: #{scheduled_cnn_refine.1} parent=11 // pred_region
        _
      $region48: #{scheduled_cnn_refine.1} parent=11 // pred_fallthru
        _
      // Predicated region
      $region49: #{scheduled_cnn_refine.1} parent=11 // pred_check
        %p377 = pneg %p309
      $region50: #{scheduled_cnn_refine.1} parent=11 // pred_check_branch
        %379 = sbr.rel (%p377) target = $region52
      $region51: #{scheduled_cnn_refine.1} parent=11 // pred_region
        _
      $region52: #{scheduled_cnn_refine.1} parent=11 // pred_fallthru
        _
    $region12: #{scheduled_cnn_refine.1} parent=5 // pred_fallthru
      _
    %p380 = scmp.lt.s32.totalorder %s21, 2
    // Predicated region
    $region53: #{scheduled_cnn_refine.1} parent=5 // pred_check
      %p381 = pneg %p380
    $region54: #{scheduled_cnn_refine.1} parent=5 // pred_check_branch
      %383 = sbr.rel (%p381) target = $region56
    $region55: #{scheduled_cnn_refine.1} parent=5 // pred_region
      // Predicated region
      $region57: #{scheduled_cnn_refine.1} parent=55 // pred_check
        %p384 = pneg %p41
      $region58: #{scheduled_cnn_refine.1} parent=55 // pred_check_branch
        %386 = sbr.rel (%p384) target = $region60
      $region59: #{scheduled_cnn_refine.1} parent=55 // pred_region
        %p387 = scmp.lt.s32.totalorder %s21, 1
        %s388 = scalar_select %p387, %s21, 1
        %s389 = smul.addr %s388, 2
        %s390 = scalar_lea.vmem %s0, %s389
      $region60: #{scheduled_cnn_refine.1} parent=55 // pred_fallthru
        _
      // Predicated region
      $region61: #{scheduled_cnn_refine.1} parent=55 // pred_check
        %p391 = pneg %p67
      $region62: #{scheduled_cnn_refine.1} parent=55 // pred_check_branch
        %393 = sbr.rel (%p391) target = $region64
      $region63: #{scheduled_cnn_refine.1} parent=55 // pred_region
        %p394 = scmp.lt.s32.totalorder %s21, 1
        %s395 = scalar_select %p394, %s21, 1
        %s396 = smul.addr %s395, 4
        %s397 = smul.addr %s396, 8
        %s398 = scalar_lea.vmem %s1, %s397
      $region64: #{scheduled_cnn_refine.1} parent=55 // pred_fallthru
        _
      // Predicated region
      $region65: #{scheduled_cnn_refine.1} parent=55 // pred_check
        %p399 = pneg %p93
      $region66: #{scheduled_cnn_refine.1} parent=55 // pred_check_branch
        %401 = sbr.rel (%p399) target = $region68
      $region67: #{scheduled_cnn_refine.1} parent=55 // pred_region
        %p402 = scmp.lt.s32.totalorder %s21, 1
        %s403 = scalar_select %p402, %s21, 1
        %s404 = smul.addr %s403, 2
        %s405 = smul.addr %s404, 8
        %s406 = scalar_lea.vmem %s2, %s405
      $region68: #{scheduled_cnn_refine.1} parent=55 // pred_fallthru
        _
    $region56: #{scheduled_cnn_refine.1} parent=5 // pred_fallthru
      _
    %p407 = scmp.le.s32.totalorder 1, %s21
    %p408 = scmp.lt.s32.totalorder %s21, 3
    %p409 = pnand %p407, %p408
    %p410 = pneg %p409
    // Predicated region
    $region69: #{scheduled_cnn_refine.1} parent=5 // pred_check
      _
    $region70: #{scheduled_cnn_refine.1} parent=5 // pred_check_branch
      %412 = sbr.rel (%p409) target = $region72
    $region71: #{scheduled_cnn_refine.1} parent=5 // pred_region
      %s413 = ssub.s32 %s21, 1
      %p414 = scmp.lt.s32.totalorder %s26, 1
      %s415 = scalar_select %p414, %s26, 1
      %s416 = smul.addr %s415, 2
      %s417 = scalar_lea.vmem %s0, %s416
      %p418 = pneg %p47
      %p419 = pneg %p44
      %p420 = scmp.lt.s32.totalorder %s26, 1
      %s421 = scalar_select %p420, %s26, 1
      %s422 = smul.addr %s421, 4
      %s423 = smul.addr %s422, 8
      %s424 = scalar_lea.vmem %s1, %s423
      %p425 = pneg %p73
      %p426 = pneg %p70
      %p427 = scmp.lt.s32.totalorder %s26, 1
      %s428 = scalar_select %p427, %s26, 1
      %s429 = smul.addr %s428, 2
      %s430 = smul.addr %s429, 8
      %s431 = scalar_lea.vmem %s2, %s430
      %p432 = pneg %p99
      %p433 = pneg %p96
      %p434 = pneg %p120
      %p435 = pneg %p117
      %p436 = pneg %p141
      %p437 = pneg %p138
      %p438 = pneg %p162
      %p439 = pneg %p159
      %p440 = pneg %p183
      %p441 = pneg %p180
      %p442 = pneg %p204
      %p443 = pneg %p201
      %p444 = pneg %p225
      %p445 = pneg %p222
      %p446 = pneg %p246
      %p447 = pneg %p243
      %p448 = pneg %p267
      %p449 = pneg %p264
      %p450 = pneg %p288
      %p451 = pneg %p285
      %p452 = pneg %p309
      %p453 = pneg %p306
      %p454 = pneg %p335
      %p455 = pneg %p332
      %p456 = scmp.lt.s32.totalorder %s26, 1
      %s457 = scalar_select %p456, %s26, 1
      %s458 = smul.addr %s457, 2
      %s459 = scalar_lea.vmem %s13, %s458
      %p460 = scmp.lt.s32.totalorder %s26, 1
      %s461 = scalar_select %p460, %s26, 1
      %s462 = smul.addr %s461, 2
      %s463 = scalar_lea.vmem %s0, %s462
      %p464 = scmp.lt.s32.totalorder %s26, 1
      %s465 = scalar_select %p464, %s26, 1
      %s466 = smul.addr %s465, 4
      %s467 = smul.addr %s466, 8
      %s468 = scalar_lea.vmem %s1, %s467
      %p469 = scmp.lt.s32.totalorder %s26, 1
      %s470 = scalar_select %p469, %s26, 1
      %s471 = smul.addr %s470, 2
      %s472 = smul.addr %s471, 8
      %s473 = scalar_lea.vmem %s2, %s472
      %p474 = scmp.lt.s32.totalorder %s26, 1
      %s475 = scalar_select %p474, %s26, 1
      %s476 = smul.addr %s475, 2
      %s477 = scalar_lea.vmem %s13, %s476
      %v478 = vld [vmem:[%s12] sm:$0x3]
      %s479 = scalar_lea.vmem %s12, 2
      %v480 = vld [vmem:[%s479] sm:$0x3]
      %s481 = scalar_lea.vmem %s12, 4
      %v482 = vld [vmem:[%s481] sm:$0x3]
      %s483 = scalar_lea.vmem %s12, 6
      %v484 = vld [vmem:[%s483] sm:$0x3]
      %s485 = scalar_lea.vmem %s12, 10
      %v486 = vld [vmem:[%s485] sm:$0x3]
      %s487 = scalar_lea.vmem %s12, 12
      %v488 = vld [vmem:[%s487] sm:$0x3]
      %s489 = scalar_lea.vmem %s12, 14
      %v490 = vld [vmem:[%s489] sm:$0x3]
      %s491 = scalar_lea.vmem %s12, 16
      %v492 = vld [vmem:[%s491] sm:$0x3]
      %v493 = vld [vmem:[%s468] sm:$0xff]
      %v494 = vld [vmem:[%s468 + $0x8] sm:$0xff]
      %v495 = vld [vmem:[%s468 + $0x10] sm:$0xff]
      %v496 = vld [vmem:[%s468 + $0x18] sm:$0xff]
      %v497 = vld [vmem:[%s473] sm:$0xff]
      %v498 = vld [vmem:[%s473 + $0x8] sm:$0xff]
      %500 = vset.pattern.permute.xlu0 0
      %501 = vperm.xlu0 %500, %v497
      %v502 = vpop.permute.xlu0 %501
      %505 = vset.pattern.permute.xlu0 0
      %506 = vperm.xlu0 %505, %v498
      %v507 = vpop.permute.xlu0 %506
      %v509 = vadd.f32 %v493, %v502
      %v510 = vadd.f32 %v494, %v502
      %v511 = vadd.f32 %v495, %v507
      %v512 = vadd.f32 %v496, %v507
      %v513 = vld [vmem:[%s4] sm:$0xff]
      %v514 = vld [vmem:[%s4 + $0x8] sm:$0xff]
      %516 = vset.pattern.permute.xlu0 0
      %517 = vperm.xlu0 %516, %v513
      %v518 = vpop.permute.xlu0 %517
      %521 = vset.pattern.permute.xlu0 0
      %522 = vperm.xlu0 %521, %v514
      %v523 = vpop.permute.xlu0 %522
      %v525 = vadd.f32 %v509, %v518
      %v526 = vadd.f32 %v510, %v518
      %v527 = vadd.f32 %v511, %v523
      %v528 = vadd.f32 %v512, %v523
      %v529 = vld [vmem:[%s463] sm:$0x3]
      %v531 = vlaneseq
      %v532 = vshrl.u32 %v531, 7
      %v533 = vsub.s32 0, %v532
      %v534 = vrot.slane %v529, %v533
      %v535 = vlaneseq
      %v536 = vshrl.u32 %v535, 7
      %v537 = vsub.s32 1, %v536
      %v538 = vrot.slane %v529, %v537
      %541 = vrot.lane.b32.xlu0 %v534, 17
      %v542 = vpop.permute.xlu0 %541
      %543 = vrot.lane.b32.xlu0 %v538, 17
      %v544 = vpop.permute.xlu0 %543
      %v545 = vlaneseq
      %v546 = vand.u32 %v545, 127
      %vm547 = vcmp.lt.s32.totalorder %v546, 17
      %v548 = vsel %vm547, %v542, %v544
      %v549 = vsel %vm547, %v544, %v542
      %v551 = vlaneseq
      %v552 = vshrl.u32 %v551, 7
      %v553 = vsub.s32 0, %v552
      %v554 = vrot.slane %v478, %v553
      %v555 = vlaneseq
      %v556 = vshrl.u32 %v555, 7
      %v557 = vsub.s32 1, %v556
      %v558 = vrot.slane %v478, %v557
      %v561 = vmul.f32 %v549, %v554
      %v562 = vmul.f32 %v548, %v558
      %563 = vrot.lane.b32.xlu0 %v534, 16
      %v564 = vpop.permute.xlu0 %563
      %565 = vrot.lane.b32.xlu0 %v538, 16
      %v566 = vpop.permute.xlu0 %565
      %vm567 = vcmp.lt.s32.totalorder %v546, 16
      %v568 = vsel %vm567, %v564, %v566
      %v569 = vsel %vm567, %v566, %v564
      %v571 = vlaneseq
      %v572 = vshrl.u32 %v571, 7
      %v573 = vsub.s32 0, %v572
      %v574 = vrot.slane %v480, %v573
      %v575 = vlaneseq
      %v576 = vshrl.u32 %v575, 7
      %v577 = vsub.s32 1, %v576
      %v578 = vrot.slane %v480, %v577
      %v581 = vmul.f32 %v569, %v574
      %v582 = vmul.f32 %v568, %v578
      %583 = vrot.lane.b32.xlu0 %v534, 15
      %v584 = vpop.permute.xlu0 %583
      %585 = vrot.lane.b32.xlu0 %v538, 15
      %v586 = vpop.permute.xlu0 %585
      %vm587 = vcmp.lt.s32.totalorder %v546, 15
      %v588 = vsel %vm587, %v584, %v586
      %v589 = vsel %vm587, %v586, %v584
      %v591 = vlaneseq
      %v592 = vshrl.u32 %v591, 7
      %v593 = vsub.s32 0, %v592
      %v594 = vrot.slane %v482, %v593
      %v595 = vlaneseq
      %v596 = vshrl.u32 %v595, 7
      %v597 = vsub.s32 1, %v596
      %v598 = vrot.slane %v482, %v597
      %v601 = vmul.f32 %v589, %v594
      %v602 = vmul.f32 %v588, %v598
      %603 = vrot.lane.b32.xlu0 %v534, 1
      %v604 = vpop.permute.xlu0 %603
      %605 = vrot.lane.b32.xlu0 %v538, 1
      %v606 = vpop.permute.xlu0 %605
      %vm607 = vcmp.lt.s32.totalorder %v546, 1
      %v608 = vsel %vm607, %v604, %v606
      %v609 = vsel %vm607, %v606, %v604
      %v611 = vlaneseq
      %v612 = vshrl.u32 %v611, 7
      %v613 = vsub.s32 0, %v612
      %v614 = vrot.slane %v484, %v613
      %v615 = vlaneseq
      %v616 = vshrl.u32 %v615, 7
      %v617 = vsub.s32 1, %v616
      %v618 = vrot.slane %v484, %v617
      %v621 = vmul.f32 %v609, %v614
      %v622 = vmul.f32 %v608, %v618
      %623 = vrot.lane.b32.xlu0 %v534, 127
      %v624 = vpop.permute.xlu0 %623
      %625 = vrot.lane.b32.xlu0 %v538, 127
      %v626 = vpop.permute.xlu0 %625
      %vm627 = vcmp.lt.s32.totalorder %v546, 127
      %v628 = vsel %vm627, %v624, %v626
      %v629 = vsel %vm627, %v626, %v624
      %v631 = vlaneseq
      %v632 = vshrl.u32 %v631, 7
      %v633 = vsub.s32 0, %v632
      %v634 = vrot.slane %v486, %v633
      %v635 = vlaneseq
      %v636 = vshrl.u32 %v635, 7
      %v637 = vsub.s32 1, %v636
      %v638 = vrot.slane %v486, %v637
      %v641 = vmul.f32 %v628, %v634
      %v642 = vmul.f32 %v629, %v638
      %643 = vrot.lane.b32.xlu0 %v534, 113
      %v644 = vpop.permute.xlu0 %643
      %645 = vrot.lane.b32.xlu0 %v538, 113
      %v646 = vpop.permute.xlu0 %645
      %vm647 = vcmp.lt.s32.totalorder %v546, 113
      %v648 = vsel %vm647, %v644, %v646
      %v649 = vsel %vm647, %v646, %v644
      %v651 = vlaneseq
      %v652 = vshrl.u32 %v651, 7
      %v653 = vsub.s32 0, %v652
      %v654 = vrot.slane %v488, %v653
      %v655 = vlaneseq
      %v656 = vshrl.u32 %v655, 7
      %v657 = vsub.s32 1, %v656
      %v658 = vrot.slane %v488, %v657
      %v661 = vmul.f32 %v648, %v654
      %v662 = vmul.f32 %v649, %v658
      %663 = vrot.lane.b32.xlu0 %v534, 112
      %v664 = vpop.permute.xlu0 %663
      %665 = vrot.lane.b32.xlu0 %v538, 112
      %v666 = vpop.permute.xlu0 %665
      %vm667 = vcmp.lt.s32.totalorder %v546, 112
      %v668 = vsel %vm667, %v664, %v666
      %v669 = vsel %vm667, %v666, %v664
      %v671 = vlaneseq
      %v672 = vshrl.u32 %v671, 7
      %v673 = vsub.s32 0, %v672
      %v674 = vrot.slane %v490, %v673
      %v675 = vlaneseq
      %v676 = vshrl.u32 %v675, 7
      %v677 = vsub.s32 1, %v676
      %v678 = vrot.slane %v490, %v677
      %v681 = vmul.f32 %v668, %v674
      %v682 = vmul.f32 %v669, %v678
      %683 = vrot.lane.b32.xlu0 %v534, 111
      %v684 = vpop.permute.xlu0 %683
      %685 = vrot.lane.b32.xlu0 %v538, 111
      %v686 = vpop.permute.xlu0 %685
      %vm687 = vcmp.lt.s32.totalorder %v546, 111
      %v688 = vsel %vm687, %v684, %v686
      %v689 = vsel %vm687, %v686, %v684
      %v691 = vlaneseq
      %v692 = vshrl.u32 %v691, 7
      %v693 = vsub.s32 0, %v692
      %v694 = vrot.slane %v492, %v693
      %v695 = vlaneseq
      %v696 = vshrl.u32 %v695, 7
      %v697 = vsub.s32 1, %v696
      %v698 = vrot.slane %v492, %v697
      %v701 = vmul.f32 %v688, %v694
      %v702 = vmul.f32 %v689, %v698
      %v703 = vld [vmem:[%s3] sm:$0xff]
      %v704 = vld [vmem:[%s3 + $0x8] sm:$0xff]
      %706 = vset.pattern.permute.xlu0 0
      %707 = vperm.xlu0 %706, %v703
      %v708 = vpop.permute.xlu0 %707
      %711 = vset.pattern.permute.xlu0 0
      %712 = vperm.xlu0 %711, %v704
      %v713 = vpop.permute.xlu0 %712
      %v715 = vlaneseq
      %v716 = vshrl.u32 %v715, 7
      %v717 = vsub.s32 0, %v716
      %v718 = vrot.slane %v561, %v717
      %v719 = vlaneseq
      %v720 = vshrl.u32 %v719, 7
      %v721 = vsub.s32 0, %v720
      %v722 = vrot.slane %v562, %v721
      %v723 = vmul.f32 %v708, %v718
      %v724 = vmul.f32 %v708, %v722
      %v725 = vmul.f32 %v713, %v718
      %v726 = vmul.f32 %v713, %v722
      %v727 = vadd.f32 %v525, %v723
      %v728 = vadd.f32 %v526, %v724
      %v729 = vadd.f32 %v527, %v725
      %v730 = vadd.f32 %v528, %v726
      %s731 = scalar_lea.vmem %s3, 16
      %v732 = vld [vmem:[%s731] sm:$0xff]
      %v733 = vld [vmem:[%s731 + $0x8] sm:$0xff]
      %735 = vset.pattern.permute.xlu0 0
      %736 = vperm.xlu0 %735, %v732
      %v737 = vpop.permute.xlu0 %736
      %740 = vset.pattern.permute.xlu0 0
      %741 = vperm.xlu0 %740, %v733
      %v742 = vpop.permute.xlu0 %741
      %v744 = vlaneseq
      %v745 = vshrl.u32 %v744, 7
      %v746 = vsub.s32 0, %v745
      %v747 = vrot.slane %v581, %v746
      %v748 = vlaneseq
      %v749 = vshrl.u32 %v748, 7
      %v750 = vsub.s32 0, %v749
      %v751 = vrot.slane %v582, %v750
      %v752 = vmul.f32 %v737, %v747
      %v753 = vmul.f32 %v737, %v751
      %v754 = vmul.f32 %v742, %v747
      %v755 = vmul.f32 %v742, %v751
      %v756 = vadd.f32 %v727, %v752
      %v757 = vadd.f32 %v728, %v753
      %v758 = vadd.f32 %v729, %v754
      %v759 = vadd.f32 %v730, %v755
      %s760 = scalar_lea.vmem %s3, 32
      %v761 = vld [vmem:[%s760] sm:$0xff]
      %v762 = vld [vmem:[%s760 + $0x8] sm:$0xff]
      %764 = vset.pattern.permute.xlu0 0
      %765 = vperm.xlu0 %764, %v761
      %v766 = vpop.permute.xlu0 %765
      %769 = vset.pattern.permute.xlu0 0
      %770 = vperm.xlu0 %769, %v762
      %v771 = vpop.permute.xlu0 %770
      %v773 = vlaneseq
      %v774 = vshrl.u32 %v773, 7
      %v775 = vsub.s32 0, %v774
      %v776 = vrot.slane %v601, %v775
      %v777 = vlaneseq
      %v778 = vshrl.u32 %v777, 7
      %v779 = vsub.s32 0, %v778
      %v780 = vrot.slane %v602, %v779
      %v781 = vmul.f32 %v766, %v776
      %v782 = vmul.f32 %v766, %v780
      %v783 = vmul.f32 %v771, %v776
      %v784 = vmul.f32 %v771, %v780
      %v785 = vadd.f32 %v756, %v781
      %v786 = vadd.f32 %v757, %v782
      %v787 = vadd.f32 %v758, %v783
      %v788 = vadd.f32 %v759, %v784
      %s789 = scalar_lea.vmem %s3, 48
      %v790 = vld [vmem:[%s789] sm:$0xff]
      %v791 = vld [vmem:[%s789 + $0x8] sm:$0xff]
      %793 = vset.pattern.permute.xlu0 0
      %794 = vperm.xlu0 %793, %v790
      %v795 = vpop.permute.xlu0 %794
      %798 = vset.pattern.permute.xlu0 0
      %799 = vperm.xlu0 %798, %v791
      %v800 = vpop.permute.xlu0 %799
      %v802 = vlaneseq
      %v803 = vshrl.u32 %v802, 7
      %v804 = vsub.s32 0, %v803
      %v805 = vrot.slane %v621, %v804
      %v806 = vlaneseq
      %v807 = vshrl.u32 %v806, 7
      %v808 = vsub.s32 0, %v807
      %v809 = vrot.slane %v622, %v808
      %v810 = vmul.f32 %v795, %v805
      %v811 = vmul.f32 %v795, %v809
      %v812 = vmul.f32 %v800, %v805
      %v813 = vmul.f32 %v800, %v809
      %v814 = vadd.f32 %v785, %v810
      %v815 = vadd.f32 %v786, %v811
      %v816 = vadd.f32 %v787, %v812
      %v817 = vadd.f32 %v788, %v813
      %s818 = scalar_lea.vmem %s3, 64
      %v819 = vld [vmem:[%s818] sm:$0xff]
      %v820 = vld [vmem:[%s818 + $0x8] sm:$0xff]
      %822 = vset.pattern.permute.xlu0 0
      %823 = vperm.xlu0 %822, %v819
      %v824 = vpop.permute.xlu0 %823
      %827 = vset.pattern.permute.xlu0 0
      %828 = vperm.xlu0 %827, %v820
      %v829 = vpop.permute.xlu0 %828
      %v831 = vmul.f32 %v824, %v534
      %v832 = vmul.f32 %v824, %v538
      %v833 = vmul.f32 %v829, %v534
      %v834 = vmul.f32 %v829, %v538
      %v835 = vadd.f32 %v814, %v831
      %v836 = vadd.f32 %v815, %v832
      %v837 = vadd.f32 %v816, %v833
      %v838 = vadd.f32 %v817, %v834
      %s839 = scalar_lea.vmem %s3, 80
      %v840 = vld [vmem:[%s839] sm:$0xff]
      %v841 = vld [vmem:[%s839 + $0x8] sm:$0xff]
      %843 = vset.pattern.permute.xlu0 0
      %844 = vperm.xlu0 %843, %v840
      %v845 = vpop.permute.xlu0 %844
      %848 = vset.pattern.permute.xlu0 0
      %849 = vperm.xlu0 %848, %v841
      %v850 = vpop.permute.xlu0 %849
      %v852 = vlaneseq
      %v853 = vshrl.u32 %v852, 7
      %v854 = vsub.s32 0, %v853
      %v855 = vrot.slane %v641, %v854
      %v856 = vlaneseq
      %v857 = vshrl.u32 %v856, 7
      %v858 = vsub.s32 0, %v857
      %v859 = vrot.slane %v642, %v858
      %v860 = vmul.f32 %v845, %v855
      %v861 = vmul.f32 %v845, %v859
      %v862 = vmul.f32 %v850, %v855
      %v863 = vmul.f32 %v850, %v859
      %v864 = vadd.f32 %v835, %v860
      %v865 = vadd.f32 %v836, %v861
      %v866 = vadd.f32 %v837, %v862
      %v867 = vadd.f32 %v838, %v863
      %s868 = scalar_lea.vmem %s3, 96
      %v869 = vld [vmem:[%s868] sm:$0xff]
      %v870 = vld [vmem:[%s868 + $0x8] sm:$0xff]
      %872 = vset.pattern.permute.xlu0 0
      %873 = vperm.xlu0 %872, %v869
      %v874 = vpop.permute.xlu0 %873
      %877 = vset.pattern.permute.xlu0 0
      %878 = vperm.xlu0 %877, %v870
      %v879 = vpop.permute.xlu0 %878
      %v881 = vlaneseq
      %v882 = vshrl.u32 %v881, 7
      %v883 = vsub.s32 0, %v882
      %v884 = vrot.slane %v661, %v883
      %v885 = vlaneseq
      %v886 = vshrl.u32 %v885, 7
      %v887 = vsub.s32 0, %v886
      %v888 = vrot.slane %v662, %v887
      %v889 = vmul.f32 %v874, %v884
      %v890 = vmul.f32 %v874, %v888
      %v891 = vmul.f32 %v879, %v884
      %v892 = vmul.f32 %v879, %v888
      %v893 = vadd.f32 %v864, %v889
      %v894 = vadd.f32 %v865, %v890
      %v895 = vadd.f32 %v866, %v891
      %v896 = vadd.f32 %v867, %v892
      %s897 = scalar_lea.vmem %s3, 112
      %v898 = vld [vmem:[%s897] sm:$0xff]
      %v899 = vld [vmem:[%s897 + $0x8] sm:$0xff]
      %901 = vset.pattern.permute.xlu0 0
      %902 = vperm.xlu0 %901, %v898
      %v903 = vpop.permute.xlu0 %902
      %906 = vset.pattern.permute.xlu0 0
      %907 = vperm.xlu0 %906, %v899
      %v908 = vpop.permute.xlu0 %907
      %v910 = vlaneseq
      %v911 = vshrl.u32 %v910, 7
      %v912 = vsub.s32 0, %v911
      %v913 = vrot.slane %v681, %v912
      %v914 = vlaneseq
      %v915 = vshrl.u32 %v914, 7
      %v916 = vsub.s32 0, %v915
      %v917 = vrot.slane %v682, %v916
      %v918 = vmul.f32 %v903, %v913
      %v919 = vmul.f32 %v903, %v917
      %v920 = vmul.f32 %v908, %v913
      %v921 = vmul.f32 %v908, %v917
      %v922 = vadd.f32 %v893, %v918
      %v923 = vadd.f32 %v894, %v919
      %v924 = vadd.f32 %v895, %v920
      %v925 = vadd.f32 %v896, %v921
      %s926 = scalar_lea.vmem %s3, 128
      %v927 = vld [vmem:[%s926] sm:$0xff]
      %v928 = vld [vmem:[%s926 + $0x8] sm:$0xff]
      %930 = vset.pattern.permute.xlu0 0
      %931 = vperm.xlu0 %930, %v927
      %v932 = vpop.permute.xlu0 %931
      %935 = vset.pattern.permute.xlu0 0
      %936 = vperm.xlu0 %935, %v928
      %v937 = vpop.permute.xlu0 %936
      %v939 = vlaneseq
      %v940 = vshrl.u32 %v939, 7
      %v941 = vsub.s32 0, %v940
      %v942 = vrot.slane %v701, %v941
      %v943 = vlaneseq
      %v944 = vshrl.u32 %v943, 7
      %v945 = vsub.s32 0, %v944
      %v946 = vrot.slane %v702, %v945
      %v947 = vmul.f32 %v932, %v942
      %v948 = vmul.f32 %v932, %v946
      %v949 = vmul.f32 %v937, %v942
      %v950 = vmul.f32 %v937, %v946
      %v951 = vadd.f32 %v922, %v947
      %v952 = vadd.f32 %v923, %v948
      %v953 = vadd.f32 %v924, %v949
      %v954 = vadd.f32 %v925, %v950
      %955 = vrot.lane.b32.xlu0 %v951, 17
      %v956 = vpop.permute.xlu0 %955
      %957 = vrot.lane.b32.xlu0 %v953, 17
      %v958 = vpop.permute.xlu0 %957
      %959 = vrot.lane.b32.xlu0 %v952, 17
      %v960 = vpop.permute.xlu0 %959
      %961 = vrot.lane.b32.xlu0 %v954, 17
      %v962 = vpop.permute.xlu0 %961
      %v963 = vsel %vm547, %v956, %v960
      %v964 = vsel %vm547, %v958, %v962
      %v965 = vsel %vm547, %v960, %v956
      %v966 = vsel %vm547, %v962, %v958
      %v967 = vmul.f32 %v965, %v554
      %v968 = vmul.f32 %v963, %v558
      %v969 = vmul.f32 %v966, %v554
      %v970 = vmul.f32 %v964, %v558
      %971 = vrot.lane.b32.xlu0 %v951, 16
      %v972 = vpop.permute.xlu0 %971
      %973 = vrot.lane.b32.xlu0 %v953, 16
      %v974 = vpop.permute.xlu0 %973
      %975 = vrot.lane.b32.xlu0 %v952, 16
      %v976 = vpop.permute.xlu0 %975
      %977 = vrot.lane.b32.xlu0 %v954, 16
      %v978 = vpop.permute.xlu0 %977
      %v979 = vsel %vm567, %v972, %v976
      %v980 = vsel %vm567, %v974, %v978
      %v981 = vsel %vm567, %v976, %v972
      %v982 = vsel %vm567, %v978, %v974
      %v983 = vmul.f32 %v981, %v574
      %v984 = vmul.f32 %v979, %v578
      %v985 = vmul.f32 %v982, %v574
      %v986 = vmul.f32 %v980, %v578
      %987 = vrot.lane.b32.xlu0 %v951, 15
      %v988 = vpop.permute.xlu0 %987
      %989 = vrot.lane.b32.xlu0 %v953, 15
      %v990 = vpop.permute.xlu0 %989
      %991 = vrot.lane.b32.xlu0 %v952, 15
      %v992 = vpop.permute.xlu0 %991
      %993 = vrot.lane.b32.xlu0 %v954, 15
      %v994 = vpop.permute.xlu0 %993
      %v995 = vsel %vm587, %v988, %v992
      %v996 = vsel %vm587, %v990, %v994
      %v997 = vsel %vm587, %v992, %v988
      %v998 = vsel %vm587, %v994, %v990
      %v999 = vmul.f32 %v997, %v594
      %v1000 = vmul.f32 %v995, %v598
      %v1001 = vmul.f32 %v998, %v594
      %v1002 = vmul.f32 %v996, %v598
      %1003 = vrot.lane.b32.xlu0 %v951, 1
      %v1004 = vpop.permute.xlu0 %1003
      %1005 = vrot.lane.b32.xlu0 %v953, 1
      %v1006 = vpop.permute.xlu0 %1005
      %1007 = vrot.lane.b32.xlu0 %v952, 1
      %v1008 = vpop.permute.xlu0 %1007
      %1009 = vrot.lane.b32.xlu0 %v954, 1
      %v1010 = vpop.permute.xlu0 %1009
      %v1011 = vsel %vm607, %v1004, %v1008
      %v1012 = vsel %vm607, %v1006, %v1010
      %v1013 = vsel %vm607, %v1008, %v1004
      %v1014 = vsel %vm607, %v1010, %v1006
      %v1015 = vmul.f32 %v1013, %v614
      %v1016 = vmul.f32 %v1011, %v618
      %v1017 = vmul.f32 %v1014, %v614
      %v1018 = vmul.f32 %v1012, %v618
      %1019 = vrot.lane.b32.xlu0 %v951, 127
      %v1020 = vpop.permute.xlu0 %1019
      %1021 = vrot.lane.b32.xlu0 %v953, 127
      %v1022 = vpop.permute.xlu0 %1021
      %1023 = vrot.lane.b32.xlu0 %v952, 127
      %v1024 = vpop.permute.xlu0 %1023
      %1025 = vrot.lane.b32.xlu0 %v954, 127
      %v1026 = vpop.permute.xlu0 %1025
      %v1027 = vsel %vm627, %v1020, %v1024
      %v1028 = vsel %vm627, %v1022, %v1026
      %v1029 = vsel %vm627, %v1024, %v1020
      %v1030 = vsel %vm627, %v1026, %v1022
      %v1031 = vmul.f32 %v1027, %v634
      %v1032 = vmul.f32 %v1029, %v638
      %v1033 = vmul.f32 %v1028, %v634
      %v1034 = vmul.f32 %v1030, %v638
      %1035 = vrot.lane.b32.xlu0 %v951, 113
      %v1036 = vpop.permute.xlu0 %1035
      %1037 = vrot.lane.b32.xlu0 %v953, 113
      %v1038 = vpop.permute.xlu0 %1037
      %1039 = vrot.lane.b32.xlu0 %v952, 113
      %v1040 = vpop.permute.xlu0 %1039
      %1041 = vrot.lane.b32.xlu0 %v954, 113
      %v1042 = vpop.permute.xlu0 %1041
      %v1043 = vsel %vm647, %v1036, %v1040
      %v1044 = vsel %vm647, %v1038, %v1042
      %v1045 = vsel %vm647, %v1040, %v1036
      %v1046 = vsel %vm647, %v1042, %v1038
      %v1047 = vmul.f32 %v1043, %v654
      %v1048 = vmul.f32 %v1045, %v658
      %v1049 = vmul.f32 %v1044, %v654
      %v1050 = vmul.f32 %v1046, %v658
      %1051 = vrot.lane.b32.xlu0 %v951, 112
      %v1052 = vpop.permute.xlu0 %1051
      %1053 = vrot.lane.b32.xlu0 %v953, 112
      %v1054 = vpop.permute.xlu0 %1053
      %1055 = vrot.lane.b32.xlu0 %v952, 112
      %v1056 = vpop.permute.xlu0 %1055
      %1057 = vrot.lane.b32.xlu0 %v954, 112
      %v1058 = vpop.permute.xlu0 %1057
      %v1059 = vsel %vm667, %v1052, %v1056
      %v1060 = vsel %vm667, %v1054, %v1058
      %v1061 = vsel %vm667, %v1056, %v1052
      %v1062 = vsel %vm667, %v1058, %v1054
      %v1063 = vmul.f32 %v1059, %v674
      %v1064 = vmul.f32 %v1061, %v678
      %v1065 = vmul.f32 %v1060, %v674
      %v1066 = vmul.f32 %v1062, %v678
      %1067 = vrot.lane.b32.xlu0 %v951, 111
      %v1068 = vpop.permute.xlu0 %1067
      %1069 = vrot.lane.b32.xlu0 %v953, 111
      %v1070 = vpop.permute.xlu0 %1069
      %1071 = vrot.lane.b32.xlu0 %v952, 111
      %v1072 = vpop.permute.xlu0 %1071
      %1073 = vrot.lane.b32.xlu0 %v954, 111
      %v1074 = vpop.permute.xlu0 %1073
      %v1075 = vsel %vm687, %v1068, %v1072
      %v1076 = vsel %vm687, %v1070, %v1074
      %v1077 = vsel %vm687, %v1072, %v1068
      %v1078 = vsel %vm687, %v1074, %v1070
      %v1079 = vmul.f32 %v1075, %v694
      %v1080 = vmul.f32 %v1077, %v698
      %v1081 = vmul.f32 %v1076, %v694
      %v1082 = vmul.f32 %v1078, %v698
      %v1083 = vld [vmem:[%s5] sm:$0xff]
      %v1084 = vld [vmem:[%s5 + $0x8] sm:$0xff]
      %v1085 = vld [vmem:[%s5 + $0x10] sm:$0xff]
      %v1086 = vld [vmem:[%s5 + $0x18] sm:$0xff]
      %v1087 = vld [vmem:[%s6] sm:$0xff]
      %v1088 = vld [vmem:[%s6 + $0x8] sm:$0xff]
      %1090 = vset.pattern.permute.xlu0 0
      %1091 = vperm.xlu0 %1090, %v1087
      %v1092 = vpop.permute.xlu0 %1091
      %1095 = vset.pattern.permute.xlu0 0
      %1096 = vperm.xlu0 %1095, %v1088
      %v1097 = vpop.permute.xlu0 %1096
      %vm1099 = vcmask 130048
      %v1101 = vsel %vm1099, %v1084, 0
      %v1104 = vsel %vm1099, %v1086, 0
      %1106 = vmatprep.subr.mxu0 %v1066
      %1107 = vmatpush1.msra.mxu0 %v1065
      %1108 = vmatprep.subr.mxu0 %v1064
      %1109 = vmatpush1.msra.mxu0 %v1063
      %1110 = vmatprep.subr.mxu0 %v1050
      %1111 = vmatpush1.msra.mxu0 %v1049
      %1112 = vmatprep.subr.mxu0 %v1048
      %1113 = vmatpush1.msra.mxu0 %v1047
      %1114 = vmatprep.subr.mxu0 %v1034
      %1115 = vmatpush1.msra.mxu0 %v1033
      %1116 = vmatprep.subr.mxu0 %v1032
      %1117 = vmatpush1.msra.mxu0 %v1031
      %1118 = vmatprep.subr.mxu0 %v954
      %1119 = vmatpush1.msra.mxu0 %v953
      %1120 = vmatprep.subr.mxu0 %v952
      %1121 = vmatpush1.msra.mxu0 %v951
      %1122 = vmatprep.subr.mxu0 %v1018
      %1123 = vmatpush1.msra.mxu0 %v1017
      %1124 = vmatprep.subr.mxu0 %v1016
      %1125 = vmatpush1.msra.mxu0 %v1015
      %1126 = vmatprep.subr.mxu0 %v1002
      %1127 = vmatpush1.msra.mxu0 %v1001
      %1128 = vmatprep.subr.mxu0 %v1000
      %1129 = vmatpush1.msra.mxu0 %v999
      %1130 = vmatprep.subr.mxu0 %v986
      %1131 = vmatpush1.msra.mxu0 %v985
      %1132 = vmatprep.subr.mxu0 %v984
      %1133 = vmatpush1.msra.mxu0 %v983
      %1134 = vmatprep.subr.mxu0 %v970
      %1135 = vmatpush1.msra.mxu0 %v969
      %1136 = vmatprep.subr.mxu0 %v968
      %1137 = vmatpush1.msra.mxu0 %v967
      %1138 = vmatprep.subr.mxu0 0.0
      %1139 = vmatpush2.msra.mxu0 0.0
      %1140 = vmatprep.subr.mxu0 0.0
      %1141 = vmatpush2.msra.mxu0 0.0
      %1142 = vmatprep.subr.mxu0 0.0
      %1143 = vmatpush2.msra.mxu0 0.0
      %1144 = vmatprep.subr.mxu0 0.0
      %1145 = vmatpush2.msra.mxu0 0.0
      %1146 = vmatprep.subr.mxu0 0.0
      %1147 = vmatpush2.msra.mxu0 0.0
      %1148 = vmatprep.subr.mxu0 0.0
      %1149 = vmatpush2.msra.mxu0 0.0
      %1150 = vmatprep.subr.mxu0 0.0
      %1151 = vmatpush2.msra.mxu0 0.0
      %1152 = vmatprep.subr.mxu0 0.0
      %1153 = vmatpush2.msra.mxu0 0.0
      %1154 = vmatprep.subr.mxu0 0.0
      %1155 = vmatpush2.msra.mxu0 0.0
      %1156 = vmatprep.subr.mxu0 0.0
      %1157 = vmatpush2.msra.mxu0 0.0
      %1158 = vmatprep.subr.mxu0 0.0
      %1159 = vmatpush2.msra.mxu0 0.0
      %1160 = vmatprep.subr.mxu0 0.0
      %1161 = vmatpush2.msra.mxu0 0.0
      %1162 = vmatprep.subr.mxu0 0.0
      %1163 = vmatpush2.msra.mxu0 0.0
      %1164 = vmatprep.subr.mxu0 0.0
      %1165 = vmatpush2.msra.mxu0 0.0
      %1166 = vmatprep.subr.mxu0 %v1082
      %1167 = vmatpush2.msra.mxu0 %v1081
      %1168 = vmatprep.subr.mxu0 %v1080
      %1169 = vmatpush2.msra.mxu0 %v1079
      %1170 = vmatprep.mubr.f32.mxu0 %v1101
      %1171 = vmatmul.mubr.f32.gmra.mxu0 %v1083
      %v1172 = vpop.f32.mrf.mxu0
      %v1173 = vadd.f32 %v1092, %v1172
      %v1174 = vpop.f32.mrf.mxu0
      %v1175 = vadd.f32 %v1092, %v1174
      %1176 = vmatprep.mubr.f32.mxu0 %v1104
      %1177 = vmatmul.mubr.f32.gmra.mxu0 %v1085
      %v1178 = vpop.f32.mrf.mxu0
      %v1179 = vadd.f32 %v1097, %v1178
      %v1180 = vpop.f32.mrf.mxu0
      %v1181 = vadd.f32 %v1097, %v1180
      %1182 = vdwg.mxu0
      %v1183 = vadd.f32 %v1173, %v1175
      %1184 = vadd.xlane.f32.xlu0 %v1183
      %v1185 = vpop.xlane.xlu0 %1184
      %v1186 = vadd.f32 %v1179, %v1181
      %1187 = vadd.xlane.f32.xlu0 %v1186
      %v1188 = vpop.xlane.xlu0 %1187
      %v1189 = vmul.f32 %v1173, %v1173
      %v1190 = vmul.f32 %v1175, %v1175
      %v1191 = vmul.f32 %v1179, %v1179
      %v1192 = vmul.f32 %v1181, %v1181
      %v1193 = vadd.f32 %v1189, %v1190
      %1194 = vadd.xlane.f32.xlu0 %v1193
      %v1195 = vpop.xlane.xlu0 %1194
      %v1196 = vadd.f32 %v1191, %v1192
      %1197 = vadd.xlane.f32.xlu0 %v1196
      %v1198 = vpop.xlane.xlu0 %1197
      %v1199 = vld [vmem:[%s11] sm:$0xff]
      %v1200 = vld [vmem:[%s11 + $0x8] sm:$0xff]
      %vm1201 = vcmask 7168
      %v1202 = vsel %vm1201, %v1185, %v1195
      %v1203 = vsel %vm1201, %v1188, %v1198
      %v1205 = vsel %vm1099, %v1199, 0
      %v1208 = vsel %vm1099, %v1200, 0
      %1210 = vmatprep.subr.mxu0 0.0
      %1211 = vmatpush1.msra.mxu0 0.0
      %1212 = vmatprep.subr.mxu0 0.0
      %1213 = vmatpush1.msra.mxu0 0.0
      %1214 = vmatprep.subr.mxu0 0.0
      %1215 = vmatpush1.msra.mxu0 0.0
      %1216 = vmatprep.subr.mxu0 0.0
      %1217 = vmatpush1.msra.mxu0 0.0
      %1218 = vmatprep.subr.mxu0 0.0
      %1219 = vmatpush1.msra.mxu0 0.0
      %1220 = vmatprep.subr.mxu0 0.0
      %1221 = vmatpush1.msra.mxu0 0.0
      %1222 = vmatprep.subr.mxu0 0.0
      %1223 = vmatpush1.msra.mxu0 0.0
      %1224 = vmatprep.subr.mxu0 0.0
      %1225 = vmatpush1.msra.mxu0 0.0
      %1226 = vmatprep.subr.mxu0 0.0
      %1227 = vmatpush1.msra.mxu0 0.0
      %1228 = vmatprep.subr.mxu0 0.0
      %1229 = vmatpush1.msra.mxu0 0.0
      %1230 = vmatprep.subr.mxu0 0.0
      %1231 = vmatpush1.msra.mxu0 0.0
      %1232 = vmatprep.subr.mxu0 0.0
      %1233 = vmatpush1.msra.mxu0 0.0
      %1234 = vmatprep.subr.mxu0 0.0
      %1235 = vmatpush1.msra.mxu0 0.0
      %1236 = vmatprep.subr.mxu0 0.0
      %1237 = vmatpush1.msra.mxu0 0.0
      %1238 = vmatprep.subr.mxu0 0.0
      %1239 = vmatpush1.msra.mxu0 %v1203
      %1240 = vmatprep.subr.mxu0 0.0
      %1241 = vmatpush1.msra.mxu0 %v1202
      %1242 = vmatprep.subr.mxu0 0.0
      %1243 = vmatpush2.msra.mxu0 0.0
      %1244 = vmatprep.subr.mxu0 0.0
      %1245 = vmatpush2.msra.mxu0 0.0
      %1246 = vmatprep.subr.mxu0 0.0
      %1247 = vmatpush2.msra.mxu0 0.0
      %1248 = vmatprep.subr.mxu0 0.0
      %1249 = vmatpush2.msra.mxu0 0.0
      %1250 = vmatprep.subr.mxu0 0.0
      %1251 = vmatpush2.msra.mxu0 0.0
      %1252 = vmatprep.subr.mxu0 0.0
      %1253 = vmatpush2.msra.mxu0 0.0
      %1254 = vmatprep.subr.mxu0 0.0
      %1255 = vmatpush2.msra.mxu0 0.0
      %1256 = vmatprep.subr.mxu0 0.0
      %1257 = vmatpush2.msra.mxu0 0.0
      %1258 = vmatprep.subr.mxu0 0.0
      %1259 = vmatpush2.msra.mxu0 0.0
      %1260 = vmatprep.subr.mxu0 0.0
      %1261 = vmatpush2.msra.mxu0 0.0
      %1262 = vmatprep.subr.mxu0 0.0
      %1263 = vmatpush2.msra.mxu0 0.0
      %1264 = vmatprep.subr.mxu0 0.0
      %1265 = vmatpush2.msra.mxu0 0.0
      %1266 = vmatprep.subr.mxu0 0.0
      %1267 = vmatpush2.msra.mxu0 0.0
      %1268 = vmatprep.subr.mxu0 0.0
      %1269 = vmatpush2.msra.mxu0 0.0
      %1270 = vmatprep.subr.mxu0 0.0
      %1271 = vmatpush2.msra.mxu0 0.0
      %1272 = vmatprep.subr.mxu0 0.0
      %1273 = vmatpush2.msra.mxu0 0.0
      %1274 = vmatprep.mubr.f32.mxu0 0.0
      %1275 = vmatmul.mubr.f32.gmra.mxu0 %v1205
      %v1276 = vpop.f32.mrf.mxu0
      %v1277 = vadd.f32 0.0, %v1276
      %v1278 = vpop.f32.mrf.mxu0
      %1279 = vmatprep.mubr.f32.mxu0 0.0
      %1280 = vmatmul.mubr.f32.gmra.mxu0 %v1208
      %v1281 = vpop.f32.mrf.mxu0
      %v1282 = vadd.f32 0.0, %v1281
      %v1283 = vpop.f32.mrf.mxu0
      %1284 = vdwg.mxu0
      %v1285 = vmul.f32 %v1277, %v1277
      %v1286 = vmul.f32 %v1282, %v1282
      %1289 = vrot.lane.b32.xlu0 %v1285, 1
      %v1290 = vpop.permute.xlu0 %1289
      %1291 = vrot.lane.b32.xlu0 %v1286, 1
      %v1292 = vpop.permute.xlu0 %1291
      %v1295 = vsub.f32 %v1277, %v1290
      %v1296 = vsub.f32 %v1282, %v1292
      %v1297 = vadd.f32 %v1295, 1e-05
      %v1298 = vadd.f32 %v1296, 1e-05
      %v1299 = vrsqrt.pop %v1297
      %v1300 = vrsqrt.pop %v1298
      %v1301 = vld [vmem:[%s7] sm:$0xff]
      %v1302 = vld [vmem:[%s7 + $0x8] sm:$0xff]
      %1305 = vrot.lane.b32.xlu0 %v1301, 1
      %v1306 = vpop.permute.xlu0 %1305
      %1307 = vrot.lane.b32.xlu0 %v1302, 1
      %v1308 = vpop.permute.xlu0 %1307
      %v1311 = vmul.f32 %v1299, %v1306
      %v1312 = vmul.f32 %v1300, %v1308
      %v1313 = vld [vmem:[%s8] sm:$0xff]
      %v1314 = vld [vmem:[%s8 + $0x8] sm:$0xff]
      %1317 = vrot.lane.b32.xlu0 %v1311, 127
      %v1318 = vpop.permute.xlu0 %1317
      %1319 = vrot.lane.b32.xlu0 %v1312, 127
      %v1320 = vpop.permute.xlu0 %1319
      %v1323 = vmul.f32 %v1277, %v1318
      %v1324 = vmul.f32 %v1282, %v1320
      %v1325 = vsub.f32 %v1313, %v1323
      %v1326 = vsub.f32 %v1314, %v1324
      %1327 = vset.pattern.permute.xlu0 1
      %1328 = vperm.xlu0 %1327, %v1311
      %v1329 = vpop.permute.xlu0 %1328
      %1331 = vset.pattern.permute.xlu0 1
      %1332 = vperm.xlu0 %1331, %v1312
      %v1333 = vpop.permute.xlu0 %1332
      %v1335 = vmul.f32 %v1173, %v1329
      %v1336 = vmul.f32 %v1175, %v1329
      %v1337 = vmul.f32 %v1179, %v1333
      %v1338 = vmul.f32 %v1181, %v1333
      %1340 = vset.pattern.permute.xlu0 0
      %1341 = vperm.xlu0 %1340, %v1325
      %v1342 = vpop.permute.xlu0 %1341
      %1345 = vset.pattern.permute.xlu0 0
      %1346 = vperm.xlu0 %1345, %v1326
      %v1347 = vpop.permute.xlu0 %1346
      %v1349 = vadd.f32 %v1335, %v1342
      %v1350 = vadd.f32 %v1336, %v1342
      %v1351 = vadd.f32 %v1337, %v1347
      %v1352 = vadd.f32 %v1338, %v1347
      %v1353 = vmax.f32 %v1349, 0.0
      %v1354 = vmax.f32 %v1350, 0.0
      %v1355 = vmax.f32 %v1351, 0.0
      %v1356 = vmax.f32 %v1352, 0.0
      %1357 = vrot.lane.b32.xlu0 %v1353, 17
      %v1358 = vpop.permute.xlu0 %1357
      %1359 = vrot.lane.b32.xlu0 %v1355, 17
      %v1360 = vpop.permute.xlu0 %1359
      %1361 = vrot.lane.b32.xlu0 %v1354, 17
      %v1362 = vpop.permute.xlu0 %1361
      %1363 = vrot.lane.b32.xlu0 %v1356, 17
      %v1364 = vpop.permute.xlu0 %1363
      %v1365 = vsel %vm547, %v1358, %v1362
      %v1366 = vsel %vm547, %v1360, %v1364
      %v1367 = vsel %vm547, %v1362, %v1358
      %v1368 = vsel %vm547, %v1364, %v1360
      %v1369 = vmul.f32 %v1367, %v554
      %v1370 = vmul.f32 %v1365, %v558
      %v1371 = vmul.f32 %v1368, %v554
      %v1372 = vmul.f32 %v1366, %v558
      %1373 = vrot.lane.b32.xlu0 %v1353, 16
      %v1374 = vpop.permute.xlu0 %1373
      %1375 = vrot.lane.b32.xlu0 %v1355, 16
      %v1376 = vpop.permute.xlu0 %1375
      %1377 = vrot.lane.b32.xlu0 %v1354, 16
      %v1378 = vpop.permute.xlu0 %1377
      %1379 = vrot.lane.b32.xlu0 %v1356, 16
      %v1380 = vpop.permute.xlu0 %1379
      %v1381 = vsel %vm567, %v1374, %v1378
      %v1382 = vsel %vm567, %v1376, %v1380
      %v1383 = vsel %vm567, %v1378, %v1374
      %v1384 = vsel %vm567, %v1380, %v1376
      %v1385 = vmul.f32 %v1383, %v574
      %v1386 = vmul.f32 %v1381, %v578
      %v1387 = vmul.f32 %v1384, %v574
      %v1388 = vmul.f32 %v1382, %v578
      %1389 = vrot.lane.b32.xlu0 %v1353, 15
      %v1390 = vpop.permute.xlu0 %1389
      %1391 = vrot.lane.b32.xlu0 %v1355, 15
      %v1392 = vpop.permute.xlu0 %1391
      %1393 = vrot.lane.b32.xlu0 %v1354, 15
      %v1394 = vpop.permute.xlu0 %1393
      %1395 = vrot.lane.b32.xlu0 %v1356, 15
      %v1396 = vpop.permute.xlu0 %1395
      %v1397 = vsel %vm587, %v1390, %v1394
      %v1398 = vsel %vm587, %v1392, %v1396
      %v1399 = vsel %vm587, %v1394, %v1390
      %v1400 = vsel %vm587, %v1396, %v1392
      %v1401 = vmul.f32 %v1399, %v594
      %v1402 = vmul.f32 %v1397, %v598
      %v1403 = vmul.f32 %v1400, %v594
      %v1404 = vmul.f32 %v1398, %v598
      %1405 = vrot.lane.b32.xlu0 %v1353, 1
      %v1406 = vpop.permute.xlu0 %1405
      %1407 = vrot.lane.b32.xlu0 %v1355, 1
      %v1408 = vpop.permute.xlu0 %1407
      %1409 = vrot.lane.b32.xlu0 %v1354, 1
      %v1410 = vpop.permute.xlu0 %1409
      %1411 = vrot.lane.b32.xlu0 %v1356, 1
      %v1412 = vpop.permute.xlu0 %1411
      %v1413 = vsel %vm607, %v1406, %v1410
      %v1414 = vsel %vm607, %v1408, %v1412
      %v1415 = vsel %vm607, %v1410, %v1406
      %v1416 = vsel %vm607, %v1412, %v1408
      %v1417 = vmul.f32 %v1415, %v614
      %v1418 = vmul.f32 %v1413, %v618
      %v1419 = vmul.f32 %v1416, %v614
      %v1420 = vmul.f32 %v1414, %v618
      %1421 = vrot.lane.b32.xlu0 %v1353, 127
      %v1422 = vpop.permute.xlu0 %1421
      %1423 = vrot.lane.b32.xlu0 %v1355, 127
      %v1424 = vpop.permute.xlu0 %1423
      %1425 = vrot.lane.b32.xlu0 %v1354, 127
      %v1426 = vpop.permute.xlu0 %1425
      %1427 = vrot.lane.b32.xlu0 %v1356, 127
      %v1428 = vpop.permute.xlu0 %1427
      %v1429 = vsel %vm627, %v1422, %v1426
      %v1430 = vsel %vm627, %v1424, %v1428
      %v1431 = vsel %vm627, %v1426, %v1422
      %v1432 = vsel %vm627, %v1428, %v1424
      %v1433 = vmul.f32 %v1429, %v634
      %v1434 = vmul.f32 %v1431, %v638
      %v1435 = vmul.f32 %v1430, %v634
      %v1436 = vmul.f32 %v1432, %v638
      %1437 = vrot.lane.b32.xlu0 %v1353, 113
      %v1438 = vpop.permute.xlu0 %1437
      %1439 = vrot.lane.b32.xlu0 %v1355, 113
      %v1440 = vpop.permute.xlu0 %1439
      %1441 = vrot.lane.b32.xlu0 %v1354, 113
      %v1442 = vpop.permute.xlu0 %1441
      %1443 = vrot.lane.b32.xlu0 %v1356, 113
      %v1444 = vpop.permute.xlu0 %1443
      %v1445 = vsel %vm647, %v1438, %v1442
      %v1446 = vsel %vm647, %v1440, %v1444
      %v1447 = vsel %vm647, %v1442, %v1438
      %v1448 = vsel %vm647, %v1444, %v1440
      %v1449 = vmul.f32 %v1445, %v654
      %v1450 = vmul.f32 %v1447, %v658
      %v1451 = vmul.f32 %v1446, %v654
      %v1452 = vmul.f32 %v1448, %v658
      %1453 = vrot.lane.b32.xlu0 %v1353, 112
      %v1454 = vpop.permute.xlu0 %1453
      %1455 = vrot.lane.b32.xlu0 %v1355, 112
      %v1456 = vpop.permute.xlu0 %1455
      %1457 = vrot.lane.b32.xlu0 %v1354, 112
      %v1458 = vpop.permute.xlu0 %1457
      %1459 = vrot.lane.b32.xlu0 %v1356, 112
      %v1460 = vpop.permute.xlu0 %1459
      %v1461 = vsel %vm667, %v1454, %v1458
      %v1462 = vsel %vm667, %v1456, %v1460
      %v1463 = vsel %vm667, %v1458, %v1454
      %v1464 = vsel %vm667, %v1460, %v1456
      %v1465 = vmul.f32 %v1461, %v674
      %v1466 = vmul.f32 %v1463, %v678
      %v1467 = vmul.f32 %v1462, %v674
      %v1468 = vmul.f32 %v1464, %v678
      %1469 = vrot.lane.b32.xlu0 %v1353, 111
      %v1470 = vpop.permute.xlu0 %1469
      %1471 = vrot.lane.b32.xlu0 %v1355, 111
      %v1472 = vpop.permute.xlu0 %1471
      %1473 = vrot.lane.b32.xlu0 %v1354, 111
      %v1474 = vpop.permute.xlu0 %1473
      %1475 = vrot.lane.b32.xlu0 %v1356, 111
      %v1476 = vpop.permute.xlu0 %1475
      %v1477 = vsel %vm687, %v1470, %v1474
      %v1478 = vsel %vm687, %v1472, %v1476
      %v1479 = vsel %vm687, %v1474, %v1470
      %v1480 = vsel %vm687, %v1476, %v1472
      %v1481 = vmul.f32 %v1477, %v694
      %v1482 = vmul.f32 %v1479, %v698
      %v1483 = vmul.f32 %v1478, %v694
      %v1484 = vmul.f32 %v1480, %v698
      %v1485 = vld [vmem:[%s9] sm:$0x3]
      %v1486 = vld [vmem:[#allocation2] sm:$0x1]
      %1488 = vset.pattern.permute.xlu0 0
      %1489 = vperm.xlu0 %1488, %v1486
      %v1490 = vpop.permute.xlu0 %1489
      %v1492 = vlaneseq
      %v1493 = vshrl.u32 %v1492, 7
      %v1494 = vsub.s32 0, %v1493
      %v1495 = vrot.slane %v1490, %v1494
      %v1497 = vlaneseq
      %v1498 = vshrl.u32 %v1497, 7
      %v1499 = vsub.s32 0, %v1498
      %v1500 = vrot.slane %v1485, %v1499
      %v1501 = vlaneseq
      %v1502 = vshrl.u32 %v1501, 7
      %v1503 = vsub.s32 1, %v1502
      %v1504 = vrot.slane %v1485, %v1503
      %v1506 = vsel %vm1099, %v1504, 0
      %1508 = vmatprep.subr.mxu0 %v1468
      %1509 = vmatpush1.msra.mxu0 %v1467
      %1510 = vmatprep.subr.mxu0 %v1466
      %1511 = vmatpush1.msra.mxu0 %v1465
      %1512 = vmatprep.subr.mxu0 %v1452
      %1513 = vmatpush1.msra.mxu0 %v1451
      %1514 = vmatprep.subr.mxu0 %v1450
      %1515 = vmatpush1.msra.mxu0 %v1449
      %1516 = vmatprep.subr.mxu0 %v1436
      %1517 = vmatpush1.msra.mxu0 %v1435
      %1518 = vmatprep.subr.mxu0 %v1434
      %1519 = vmatpush1.msra.mxu0 %v1433
      %1520 = vmatprep.subr.mxu0 %v1356
      %1521 = vmatpush1.msra.mxu0 %v1355
      %1522 = vmatprep.subr.mxu0 %v1354
      %1523 = vmatpush1.msra.mxu0 %v1353
      %1524 = vmatprep.subr.mxu0 %v1420
      %1525 = vmatpush1.msra.mxu0 %v1419
      %1526 = vmatprep.subr.mxu0 %v1418
      %1527 = vmatpush1.msra.mxu0 %v1417
      %1528 = vmatprep.subr.mxu0 %v1404
      %1529 = vmatpush1.msra.mxu0 %v1403
      %1530 = vmatprep.subr.mxu0 %v1402
      %1531 = vmatpush1.msra.mxu0 %v1401
      %1532 = vmatprep.subr.mxu0 %v1388
      %1533 = vmatpush1.msra.mxu0 %v1387
      %1534 = vmatprep.subr.mxu0 %v1386
      %1535 = vmatpush1.msra.mxu0 %v1385
      %1536 = vmatprep.subr.mxu0 %v1372
      %1537 = vmatpush1.msra.mxu0 %v1371
      %1538 = vmatprep.subr.mxu0 %v1370
      %1539 = vmatpush1.msra.mxu0 %v1369
      %1540 = vmatprep.subr.mxu0 0.0
      %1541 = vmatpush2.msra.mxu0 0.0
      %1542 = vmatprep.subr.mxu0 0.0
      %1543 = vmatpush2.msra.mxu0 0.0
      %1544 = vmatprep.subr.mxu0 0.0
      %1545 = vmatpush2.msra.mxu0 0.0
      %1546 = vmatprep.subr.mxu0 0.0
      %1547 = vmatpush2.msra.mxu0 0.0
      %1548 = vmatprep.subr.mxu0 0.0
      %1549 = vmatpush2.msra.mxu0 0.0
      %1550 = vmatprep.subr.mxu0 0.0
      %1551 = vmatpush2.msra.mxu0 0.0
      %1552 = vmatprep.subr.mxu0 0.0
      %1553 = vmatpush2.msra.mxu0 0.0
      %1554 = vmatprep.subr.mxu0 0.0
      %1555 = vmatpush2.msra.mxu0 0.0
      %1556 = vmatprep.subr.mxu0 0.0
      %1557 = vmatpush2.msra.mxu0 0.0
      %1558 = vmatprep.subr.mxu0 0.0
      %1559 = vmatpush2.msra.mxu0 0.0
      %1560 = vmatprep.subr.mxu0 0.0
      %1561 = vmatpush2.msra.mxu0 0.0
      %1562 = vmatprep.subr.mxu0 0.0
      %1563 = vmatpush2.msra.mxu0 0.0
      %1564 = vmatprep.subr.mxu0 0.0
      %1565 = vmatpush2.msra.mxu0 0.0
      %1566 = vmatprep.subr.mxu0 0.0
      %1567 = vmatpush2.msra.mxu0 0.0
      %1568 = vmatprep.subr.mxu0 %v1484
      %1569 = vmatpush2.msra.mxu0 %v1483
      %1570 = vmatprep.subr.mxu0 %v1482
      %1571 = vmatpush2.msra.mxu0 %v1481
      %1572 = vmatprep.mubr.f32.mxu0 %v1506
      %1573 = vmatmul.mubr.f32.gmra.mxu0 %v1500
      %v1574 = vpop.f32.mrf.mxu0
      %v1575 = vadd.f32 %v1495, %v1574
      %v1576 = vpop.f32.mrf.mxu0
      %v1577 = vadd.f32 %v1495, %v1576
      %1578 = vdwg.mxu0
      %v1581 = vcombine.low %v1575, %v1577
      %v1583 = vunpack.c.l.s4 1966171168
      %v1584 = vunpack.c.0.s8 %v1583
      %v1585 = vlaneseq
      %v1586 = vshrl.u32 %v1585, 7
      %v1587 = vsub.s32 %v1584, %v1586
      %v1588 = vrot.slane %v1581, %v1587
      %v1590 = vunpack.c.l.s4 1966171168
      %v1591 = vunpack.c.0.s8 %v1590
      %v1592 = vlaneseq
      %v1593 = vshrl.u32 %v1592, 7
      %v1594 = vsub.s32 %v1591, %v1593
      %v1595 = vrot.slane %v1588, %v1594
      %v1597 = vlaneseq
      %vm1598 = vcmp.ge.s32.totalorder %v1597, 0
      %vm1599 = vcmp.lt.s32.totalorder %v1597, 256
      %vm1600 = vmand %vm1598, %vm1599
      %1601 = vst.msk [vmem:[%s477] sm:$0x3] %vm1600, %v1595
      %p1602 = scmp.lt.s32.totalorder %s26, 1
      %s1603 = scalar_select %p1602, %s26, 1
      %s1604 = smul.addr %s1603, 2
      %s1605 = scalar_lea.vmem %s13, %s1604
      // Predicated region
      $region73: #{scheduled_cnn_refine.1} parent=71 // pred_check
        %p1606 = pneg %p332
      $region74: #{scheduled_cnn_refine.1} parent=71 // pred_check_branch
        %1608 = sbr.rel (%p1606) target = $region76
      $region75: #{scheduled_cnn_refine.1} parent=71 // pred_region
        _
      $region76: #{scheduled_cnn_refine.1} parent=71 // pred_fallthru
        _
    $region72: #{scheduled_cnn_refine.1} parent=5 // pred_fallthru
      _
    %p1609 = scmp.le.s32.totalorder 2, %s21
    // Predicated region
    $region77: #{scheduled_cnn_refine.1} parent=5 // pred_check
      %p1610 = pneg %p1609
    $region78: #{scheduled_cnn_refine.1} parent=5 // pred_check_branch
      %1612 = sbr.rel (%p1610) target = $region80
    $region79: #{scheduled_cnn_refine.1} parent=5 // pred_region
      %s1613 = ssub.s32 %s21, 2
      // Predicated region
      $region81: #{scheduled_cnn_refine.1} parent=79 // pred_check
        %p1614 = pneg %p338
      $region82: #{scheduled_cnn_refine.1} parent=79 // pred_check_branch
        %1616 = sbr.rel (%p1614) target = $region84
      $region83: #{scheduled_cnn_refine.1} parent=79 // pred_region
        %p1617 = scmp.lt.s32.totalorder %s27, 1
        %s1618 = scalar_select %p1617, %s27, 1
        %s1619 = smul.addr %s1618, 2
        %s1620 = scalar_lea.vmem %s13, %s1619
      $region84: #{scheduled_cnn_refine.1} parent=79 // pred_fallthru
        _
    $region80: #{scheduled_cnn_refine.1} parent=5 // pred_fallthru
      _
  $region6: #{scheduled_cnn_refine.1} parent=0 // loop_footer
    %s25 = sadd.s32 1, %s21
  $region7: #{scheduled_cnn_refine.1} parent=0 // loop_footer_branch
    %20 = sbr.rel target = $region3
  $region8: #{scheduled_cnn_refine.1} parent=0 // loop_exit
    _

</llo_original>
